<compile_context>
chip_gen: v7x
topology: tpu7x:2x2x1
jax: 0.10.0
libtpu: 0.0.40
codegen_flags: <defaults>
</compile_context>

<pallas_src>
import jax
import jax.numpy as jnp
import numpy as np
from jax.experimental import pallas as pl
from jax.experimental.pallas import tpu as pltpu

# Hyper-parameters from DuellingRlModule / BaseModule / StepThreeModule defaults
SRC_DIMS = 23      # graph_src_dims
DST_DIMS = 27      # graph_dst_dims
HIDDEN = 16        # graph_hidden_dims
HEADS = 5          # graph_heads
INTER_DIMS = 512   # intermediate layer
HEAD_DIMS = 128    # head_dims
OUT_DIMS = 3       # out_dims
NEG_SLOPE = 0.2    # GATv2Conv leaky_relu negative_slope
HH = HEADS * HIDDEN  # 80 = lane-stacked head features

PARAM_ORDER = ['w_dst', 'b_dst', 'w_src', 'b_src', 'w_l', 'b_l', 'w_r', 'b_r',
               'att', 'gat_b', 'w_int', 'b_int', 'w_a1', 'b_a1', 'w_a2', 'b_a2',
               'w_v1', 'b_v1', 'w_v2', 'b_v2']


def _leaky_relu(x):
    return jnp.where(x > 0, x, NEG_SLOPE * x)


def duelling_kernel(dst_x_ref, src_x_ref, idx_row_ref, idx_col_ref,
                    w_enc_ref, w_gat_ref, att_ref, w_int_ref,
                    w_h1_ref, w_h2_ref, bias_ref, out_ref):
    f32 = jnp.float32
    relu = lambda x: jnp.maximum(x, 0.0)

    tb = dst_x_ref.shape[0]            # dst rows in this batch tile
    n = src_x_ref.shape[0]             # flat src nodes (all of them, every tile)

    dst_x = dst_x_ref[...]             # (TB, 27)
    src_x = src_x_ref[...]             # (N, 23)
    idx_row = idx_row_ref[...]         # (1, N) int32
    idx_col = idx_col_ref[...]         # (N, 1) int32

    # --- node encoders: Linear + ReLU (weights packed into one buffer) ---
    dst_enc = relu(jnp.dot(dst_x, w_enc_ref[0:DST_DIMS, :], preferred_element_type=f32)
                   + bias_ref[0:1, 0:HIDDEN])                       # (TB, 16)
    src_enc = relu(jnp.dot(src_x, w_enc_ref[32:32 + SRC_DIMS, :], preferred_element_type=f32)
                   + bias_ref[1:2, 0:HIDDEN])                       # (N, 16)

    # --- dense edge assignment for this batch tile, rebuilt from dst_idx in-kernel ---
    row0 = pl.program_id(0) * tb
    A = ((jax.lax.broadcasted_iota(jnp.int32, (tb, n), 0) + row0) == idx_row).astype(f32)   # (TB, N)
    At = ((jax.lax.broadcasted_iota(jnp.int32, (n, tb), 1) + row0) == idx_col).astype(f32)  # (N, TB)

    # --- fused 5-head GATv2 (bipartite src->dst), heads lane-stacked as 80 features ---
    xl = jnp.dot(src_enc, w_gat_ref[0:HIDDEN, :], preferred_element_type=f32) \
        + bias_ref[2:3, 0:HH]                                       # (N, 80)
    xr = jnp.dot(dst_enc, w_gat_ref[HIDDEN:2 * HIDDEN, :], preferred_element_type=f32) \
        + bias_ref[3:4, 0:HH]                                       # (TB, 80)
    xr_per_src = jnp.dot(At, xr, preferred_element_type=f32)        # (N, 80) dst feat per edge
    s = xl + xr_per_src
    e = _leaky_relu(s)                                              # (N, 80)

    att_blk = att_ref[...]                                          # (HEADS, 80) block-structured
    # per-head logits in both orientations straight off the MXU (no XLU reduce / transpose)
    logits = jax.lax.dot_general(e, att_blk, (((1,), (1,)), ((), ())),
                                 preferred_element_type=f32)        # (N, HEADS)
    logits_t = jax.lax.dot_general(att_blk, e, (((1,), (1,)), ((), ())),
                                   preferred_element_type=f32)      # (HEADS, N)

    # per-dst (segment) max -> numerically robust softmax shift (review correctness item)
    neg = (1.0 - A) * (-1e30)                                       # (TB, N)
    seg_max = jnp.concatenate(
        [jnp.max(A * logits_t[h:h + 1, :] + neg, axis=1, keepdims=True) for h in range(HEADS)],
        axis=1)                                                     # (TB, HEADS)
    shift = jnp.dot(At, seg_max, preferred_element_type=f32)        # (N, HEADS) per-src segment max
    in_tile = (idx_col >= row0) & (idx_col < row0 + tb)             # (N, 1) src belongs to this tile
    z = jnp.where(in_tile, logits - shift, -1e30)
    p = jnp.exp(z)                                                  # (N, HEADS); 0 for out-of-tile src

    denom = jnp.dot(A, p, preferred_element_type=f32)               # (TB, HEADS) per-dst sum
    denom_per_src = jnp.dot(At, denom, preferred_element_type=f32)  # (N, HEADS)
    # eps only guards masked-out src rows (p == 0, denom == 0); attended segments have denom >= 1
    alpha = p / (denom_per_src + 1e-20)                             # (N, HEADS)

    # expand (N, HEADS) -> (N, 80) with a 0/1 head-expansion matrix (MXU, no lane repeat)
    c_ids = jax.lax.broadcasted_iota(jnp.int32, (HEADS, HH), 1)
    r_ids = jax.lax.broadcasted_iota(jnp.int32, (HEADS, HH), 0)
    expand = ((c_ids >= r_ids * HIDDEN) & (c_ids < (r_ids + 1) * HIDDEN)).astype(f32)   # (HEADS, 80)
    alpha_exp = jnp.dot(alpha, expand, preferred_element_type=f32)  # (N, 80)

    agg = jnp.dot(A, alpha_exp * xl, preferred_element_type=f32)    # (TB, 80)
    conv = relu(agg + bias_ref[4:5, 0:HH])                          # torch.relu(graph_conv(...))

    # --- intermediate: concat([dst_enc, conv]) @ W_int as two partial matmuls ---
    inter = relu(jnp.dot(dst_enc, w_int_ref[0:HIDDEN, :], preferred_element_type=f32)
                 + jnp.dot(conv, w_int_ref[HIDDEN:(HEADS + 1) * HIDDEN, :],
                           preferred_element_type=f32)
                 + bias_ref[5:6, :])                                # (TB, 512)

    # --- fused duelling heads: [w_a1 | w_v1] then block-diag [w_a2 ; w_v2] ---
    h1 = relu(jnp.dot(inter, w_h1_ref[...], preferred_element_type=f32)
              + bias_ref[6:7, 0:2 * HEAD_DIMS])                     # (TB, 256)
    h2 = jnp.dot(h1, w_h2_ref[...], preferred_element_type=f32) \
        + bias_ref[7:8, 0:OUT_DIMS + 1]                             # (TB, 4)
    adv = h2[:, 0:OUT_DIMS]                                         # (TB, 3)
    val = h2[:, OUT_DIMS:OUT_DIMS + 1]                              # (TB, 1)

    out_ref[...] = val + (adv - jnp.mean(adv, axis=1, keepdims=True))   # (TB, 3)


def pack_params(p):
    """Host-side packing of the 20 logical parameters into 7 DMA-friendly buffers."""
    w_enc = jnp.zeros((64, HIDDEN), jnp.float32)
    w_enc = w_enc.at[0:DST_DIMS].set(p['w_dst']).at[32:32 + SRC_DIMS].set(p['w_src'])

    w_l_packed = jnp.concatenate([p['w_l'][h] for h in range(HEADS)], axis=1)   # (16, 80)
    w_r_packed = jnp.concatenate([p['w_r'][h] for h in range(HEADS)], axis=1)   # (16, 80)
    w_gat = jnp.concatenate([w_l_packed, w_r_packed], axis=0)                   # (32, 80)

    att_blk = jnp.zeros((HEADS, HH), jnp.float32)
    for h in range(HEADS):
        att_blk = att_blk.at[h, HIDDEN * h:HIDDEN * (h + 1)].set(p['att'][h])   # (5, 80)

    w_head1 = jnp.concatenate([p['w_a1'], p['w_v1']], axis=1)                   # (512, 256)
    w_head2 = jnp.zeros((2 * HEAD_DIMS, OUT_DIMS + 1), jnp.float32)
    w_head2 = w_head2.at[0:HEAD_DIMS, 0:OUT_DIMS].set(p['w_a2'])
    w_head2 = w_head2.at[HEAD_DIMS:, OUT_DIMS:].set(p['w_v2'])                  # (256, 4)

    biases = jnp.zeros((8, INTER_DIMS), jnp.float32)
    biases = biases.at[0, :HIDDEN].set(p['b_dst'][0])
    biases = biases.at[1, :HIDDEN].set(p['b_src'][0])
    biases = biases.at[2, :HH].set(p['b_l'].reshape(-1))
    biases = biases.at[3, :HH].set(p['b_r'].reshape(-1))
    biases = biases.at[4, :HH].set(p['gat_b'].reshape(-1))
    biases = biases.at[5, :].set(p['b_int'][0])
    biases = biases.at[6, :HEAD_DIMS].set(p['b_a1'][0])
    biases = biases.at[6, HEAD_DIMS:2 * HEAD_DIMS].set(p['b_v1'][0])
    biases = biases.at[7, :OUT_DIMS].set(p['b_a2'][0])
    biases = biases.at[7, OUT_DIMS:OUT_DIMS + 1].set(p['b_v2'][0])

    return {'w_enc': w_enc, 'w_gat': w_gat, 'att_blk': att_blk, 'w_int': p['w_int'],
            'w_head1': w_head1, 'w_head2': w_head2, 'biases': biases}


def duelling_forward(dst_x, src_x, dst_idx, packed):
    B = dst_x.shape[0]
    N = src_x.shape[0]
    # batch-tile the dst axis: single tile for small B, 128-row "parallel" tiles for large B
    TB = B if B <= 128 else 128
    grid = (pl.cdiv(B, TB),)

    idx_row = jnp.asarray(dst_idx, jnp.int32).reshape(1, N)
    idx_col = jnp.asarray(dst_idx, jnp.int32).reshape(N, 1)

    def fixed(shape):
        nd = len(shape)
        return pl.BlockSpec(shape, lambda i, _nd=nd: (0,) * _nd)

    in_specs = [
        pl.BlockSpec((TB, DST_DIMS), lambda i: (i, 0)),   # dst_x  (tiled over batch)
        fixed(src_x.shape),                               # src_x
        fixed(idx_row.shape),                             # dst_idx as a row
        fixed(idx_col.shape),                             # dst_idx as a column
        fixed(packed['w_enc'].shape),
        fixed(packed['w_gat'].shape),
        fixed(packed['att_blk'].shape),
        fixed(packed['w_int'].shape),
        fixed(packed['w_head1'].shape),
        fixed(packed['w_head2'].shape),
        fixed(packed['biases'].shape),
    ]
    out_spec = pl.BlockSpec((TB, OUT_DIMS), lambda i: (i, 0))

    return pl.pallas_call(
        duelling_kernel,
        out_shape=jax.ShapeDtypeStruct((B, OUT_DIMS), jnp.float32),
        grid=grid,
        in_specs=in_specs,
        out_specs=out_spec,
        compiler_params=pltpu.CompilerParams(dimension_semantics=("parallel",)),
    )(dst_x, src_x, idx_row, idx_col,
      packed['w_enc'], packed['w_gat'], packed['att_blk'], packed['w_int'],
      packed['w_head1'], packed['w_head2'], packed['biases'])


def init_params(key):
    keys = dict(zip(PARAM_ORDER, jax.random.split(key, len(PARAM_ORDER))))

    def w(name, shape, fan_in):
        return jax.random.normal(keys[name], shape, jnp.float32) / np.sqrt(fan_in)

    def b(name, shape):
        return 0.05 * jax.random.normal(keys[name], shape, jnp.float32)

    return {
        'w_dst': w('w_dst', (DST_DIMS, HIDDEN), DST_DIMS),
        'b_dst': b('b_dst', (1, HIDDEN)),
        'w_src': w('w_src', (SRC_DIMS, HIDDEN), SRC_DIMS),
        'b_src': b('b_src', (1, HIDDEN)),
        'w_l': w('w_l', (HEADS, HIDDEN, HIDDEN), HIDDEN),
        'b_l': b('b_l', (HEADS, HIDDEN)),
        'w_r': w('w_r', (HEADS, HIDDEN, HIDDEN), HIDDEN),
        'b_r': b('b_r', (HEADS, HIDDEN)),
        'att': w('att', (HEADS, HIDDEN), HIDDEN),
        'gat_b': b('gat_b', (HEADS, HIDDEN)),
        'w_int': w('w_int', ((HEADS + 1) * HIDDEN, INTER_DIMS), (HEADS + 1) * HIDDEN),
        'b_int': b('b_int', (1, INTER_DIMS)),
        'w_a1': w('w_a1', (INTER_DIMS, HEAD_DIMS), INTER_DIMS),
        'b_a1': b('b_a1', (1, HEAD_DIMS)),
        'w_a2': w('w_a2', (HEAD_DIMS, OUT_DIMS), HEAD_DIMS),
        'b_a2': b('b_a2', (1, OUT_DIMS)),
        'w_v1': w('w_v1', (INTER_DIMS, HEAD_DIMS), INTER_DIMS),
        'b_v1': b('b_v1', (1, HEAD_DIMS)),
        'w_v2': w('w_v2', (HEAD_DIMS, 1), HEAD_DIMS),
        'b_v2': b('b_v2', (1, 1)),
    }


def reference_forward(dst_x, src_x, dst_idx, p):
    """Pure-JAX reference matching the PyTorch semantics (GATv2Conv + duelling heads)."""
    relu = lambda x: jnp.maximum(x, 0.0)
    B = dst_x.shape[0]
    dst_enc = relu(dst_x @ p['w_dst'] + p['b_dst'])
    src_enc = relu(src_x @ p['w_src'] + p['b_src'])
    convs = []
    for h in range(HEADS):
        xl = src_enc @ p['w_l'][h] + p['b_l'][h]
        xr = dst_enc @ p['w_r'][h] + p['b_r'][h]
        e = _leaky_relu(xl + xr[dst_idx])
        logit = jnp.sum(e * p['att'][h], axis=-1)
        logit = logit - jnp.max(logit)
        ex = jnp.exp(logit)
        denom = jax.ops.segment_sum(ex, dst_idx, num_segments=B)
        alpha = ex / denom[dst_idx]
        agg = jax.ops.segment_sum(alpha[:, None] * xl, dst_idx, num_segments=B)
        convs.append(relu(agg + p['gat_b'][h]))
    feat = jnp.concatenate([dst_enc] + convs, axis=-1)
    inter = relu(feat @ p['w_int'] + p['b_int'])
    adv = relu(inter @ p['w_a1'] + p['b_a1']) @ p['w_a2'] + p['b_a2']
    val = relu(inter @ p['w_v1'] + p['b_v1']) @ p['w_v2'] + p['b_v2']
    return val + (adv - jnp.mean(adv, axis=1, keepdims=True))


if __name__ == "__main__":
    key = jax.random.PRNGKey(0)
    k_params, k_dst, k_src = jax.random.split(key, 3)
    params = init_params(k_params)
    packed = pack_params(params)

    B = 4                                                               # batch of RL states (dst nodes)
    dst_idx = np.array([0, 0, 0, 1, 1, 2, 2, 2, 2, 2], dtype=np.int32)  # dst 3 has no src edges
    N = dst_idx.shape[0]                                                # flat "other vehicle" src nodes
    dst_x = jax.random.normal(k_dst, (B, DST_DIMS), jnp.float32)
    src_x = jax.random.normal(k_src, (N, SRC_DIMS), jnp.float32)

    out = duelling_forward(dst_x, src_x, jnp.asarray(dst_idx), packed)
    out = jax.block_until_ready(out)

    ref = reference_forward(dst_x, src_x, jnp.asarray(dst_idx), params)
    assert out.shape == (B, OUT_DIMS)
    assert bool(jnp.all(jnp.isfinite(out)))
    np.testing.assert_allclose(np.asarray(out), np.asarray(ref), rtol=2e-2, atol=2e-2)
    print("KERNEL_OK")
</pallas_src>

<mosaic_0001>
module attributes {stable_mosaic.version = 11 : i64} {
  func.func @duelling_kernel(%arg0: i32, %arg1: memref<4x27xf32, #tpu.memory_space<vmem>>, %arg2: memref<10x23xf32, #tpu.memory_space<vmem>>, %arg3: memref<1x10xi32, #tpu.memory_space<vmem>>, %arg4: memref<10x1xi32, #tpu.memory_space<vmem>>, %arg5: memref<64x16xf32, #tpu.memory_space<vmem>>, %arg6: memref<32x80xf32, #tpu.memory_space<vmem>>, %arg7: memref<5x80xf32, #tpu.memory_space<vmem>>, %arg8: memref<96x512xf32, #tpu.memory_space<vmem>>, %arg9: memref<512x256xf32, #tpu.memory_space<vmem>>, %arg10: memref<256x4xf32, #tpu.memory_space<vmem>>, %arg11: memref<8x512xf32, #tpu.memory_space<vmem>>, %arg12: memref<4x3xf32, #tpu.memory_space<vmem>>) attributes {dimension_semantics = [#tpu.dimension_semantics<parallel>], iteration_bounds = array<i64: 1>, scalar_prefetch = 0 : i64, scratch_operands = 0 : i64, tpu.core_type = #tpu.core_type<tc>, window_params = [{transform_indices = @transform_0, window_bounds = array<i64: 4, 27>}, {pipeline_mode = #tpu.pipeline_mode<synchronous>, transform_indices = @transform_1, window_bounds = array<i64: 10, 23>}, {pipeline_mode = #tpu.pipeline_mode<synchronous>, transform_indices = @transform_2, window_bounds = array<i64: 1, 10>}, {pipeline_mode = #tpu.pipeline_mode<synchronous>, transform_indices = @transform_3, window_bounds = array<i64: 10, 1>}, {pipeline_mode = #tpu.pipeline_mode<synchronous>, transform_indices = @transform_4, window_bounds = array<i64: 64, 16>}, {pipeline_mode = #tpu.pipeline_mode<synchronous>, transform_indices = @transform_5, window_bounds = array<i64: 32, 80>}, {pipeline_mode = #tpu.pipeline_mode<synchronous>, transform_indices = @transform_6, window_bounds = array<i64: 5, 80>}, {pipeline_mode = #tpu.pipeline_mode<synchronous>, transform_indices = @transform_7, window_bounds = array<i64: 96, 512>}, {pipeline_mode = #tpu.pipeline_mode<synchronous>, transform_indices = @transform_8, window_bounds = array<i64: 512, 256>}, {pipeline_mode = #tpu.pipeline_mode<synchronous>, transform_indices = @transform_9, window_bounds = array<i64: 256, 4>}, {pipeline_mode = #tpu.pipeline_mode<synchronous>, transform_indices = @transform_10, window_bounds = array<i64: 8, 512>}, {transform_indices = @transform_11, window_bounds = array<i64: 4, 3>}]} {
    %c0 = arith.constant 0 : index
    %c0_0 = arith.constant 0 : index
    %0 = vector.load %arg1[%c0, %c0_0] : memref<4x27xf32, #tpu.memory_space<vmem>>, vector<4x27xf32>
    %c0_1 = arith.constant 0 : index
    %c0_2 = arith.constant 0 : index
    %1 = vector.load %arg2[%c0_1, %c0_2] : memref<10x23xf32, #tpu.memory_space<vmem>>, vector<10x23xf32>
    %c0_3 = arith.constant 0 : index
    %c0_4 = arith.constant 0 : index
    %2 = vector.load %arg3[%c0_3, %c0_4] : memref<1x10xi32, #tpu.memory_space<vmem>>, vector<1x10xi32>
    %c0_5 = arith.constant 0 : index
    %c0_6 = arith.constant 0 : index
    %3 = vector.load %arg4[%c0_5, %c0_6] : memref<10x1xi32, #tpu.memory_space<vmem>>, vector<10x1xi32>
    %c0_7 = arith.constant 0 : index
    %c0_8 = arith.constant 0 : index
    %4 = vector.load %arg5[%c0_7, %c0_8] : memref<64x16xf32, #tpu.memory_space<vmem>>, vector<27x16xf32>
    %cst = arith.constant dense<0.000000e+00> : vector<4x16xf32>
    %5 = tpu.matmul %0, %4, %cst {dimension_numbers = #tpu.dot_dimension_numbers<[1], [0], [0], [1], [0, 0, 1, 1], [], []>} : vector<4x27xf32>, vector<27x16xf32>, vector<4x16xf32> -> vector<4x16xf32>
    %c0_9 = arith.constant 0 : index
    %c0_10 = arith.constant 0 : index
    %6 = vector.load %arg11[%c0_9, %c0_10] : memref<8x512xf32, #tpu.memory_space<vmem>>, vector<1x16xf32>
    %7 = vector.broadcast %6 : vector<1x16xf32> to vector<4x16xf32>
    %8 = arith.addf %5, %7 : vector<4x16xf32>
    %cst_11 = arith.constant 0.000000e+00 : f32
    %9 = vector.broadcast %cst_11 : f32 to vector<4x16xf32>
    %10 = arith.maximumf %8, %9 : vector<4x16xf32>
    %c32 = arith.constant 32 : index
    %c0_12 = arith.constant 0 : index
    %11 = vector.load %arg5[%c32, %c0_12] : memref<64x16xf32, #tpu.memory_space<vmem>>, vector<23x16xf32>
    %cst_13 = arith.constant dense<0.000000e+00> : vector<10x16xf32>
    %12 = tpu.matmul %1, %11, %cst_13 {dimension_numbers = #tpu.dot_dimension_numbers<[1], [0], [0], [1], [0, 0, 1, 1], [], []>} : vector<10x23xf32>, vector<23x16xf32>, vector<10x16xf32> -> vector<10x16xf32>
    %c1 = arith.constant 1 : index
    %c0_14 = arith.constant 0 : index
    %13 = vector.load %arg11[%c1, %c0_14] : memref<8x512xf32, #tpu.memory_space<vmem>>, vector<1x16xf32>
    %14 = vector.broadcast %13 : vector<1x16xf32> to vector<10x16xf32>
    %15 = arith.addf %12, %14 : vector<10x16xf32>
    %cst_15 = arith.constant 0.000000e+00 : f32
    %16 = vector.broadcast %cst_15 : f32 to vector<10x16xf32>
    %17 = arith.maximumf %15, %16 : vector<10x16xf32>
    %c4_i32 = arith.constant 4 : i32
    %18 = arith.muli %arg0, %c4_i32 : i32
    %19 = tpu.iota {dimensions = array<i32: 0>} : vector<4x10xi32>
    %20 = vector.broadcast %18 : i32 to vector<4x10xi32>
    %21 = arith.addi %19, %20 : vector<4x10xi32>
    %22 = vector.broadcast %2 : vector<1x10xi32> to vector<4x10xi32>
    %23 = arith.cmpi eq, %21, %22 : vector<4x10xi32>
    %24 = arith.extui %23 : vector<4x10xi1> to vector<4x10xi32>
    %25 = arith.sitofp %24 : vector<4x10xi32> to vector<4x10xf32>
    %26 = tpu.iota {dimensions = array<i32: 1>} : vector<10x4xi32>
    %27 = vector.broadcast %18 : i32 to vector<10x4xi32>
    %28 = arith.addi %26, %27 : vector<10x4xi32>
    %29 = vector.broadcast %3 : vector<10x1xi32> to vector<10x4xi32>
    %30 = arith.cmpi eq, %28, %29 : vector<10x4xi32>
    %31 = arith.extui %30 : vector<10x4xi1> to vector<10x4xi32>
    %32 = arith.sitofp %31 : vector<10x4xi32> to vector<10x4xf32>
    %c0_16 = arith.constant 0 : index
    %c0_17 = arith.constant 0 : index
    %33 = vector.load %arg6[%c0_16, %c0_17] : memref<32x80xf32, #tpu.memory_space<vmem>>, vector<16x80xf32>
    %cst_18 = arith.constant dense<0.000000e+00> : vector<10x80xf32>
    %34 = tpu.matmul %17, %33, %cst_18 {dimension_numbers = #tpu.dot_dimension_numbers<[1], [0], [0], [1], [0, 0, 1, 1], [], []>} : vector<10x16xf32>, vector<16x80xf32>, vector<10x80xf32> -> vector<10x80xf32>
    %c2 = arith.constant 2 : index
    %c0_19 = arith.constant 0 : index
    %35 = vector.load %arg11[%c2, %c0_19] : memref<8x512xf32, #tpu.memory_space<vmem>>, vector<1x80xf32>
    %36 = vector.broadcast %35 : vector<1x80xf32> to vector<10x80xf32>
    %37 = arith.addf %34, %36 : vector<10x80xf32>
    %c16 = arith.constant 16 : index
    %c0_20 = arith.constant 0 : index
    %38 = vector.load %arg6[%c16, %c0_20] : memref<32x80xf32, #tpu.memory_space<vmem>>, vector<16x80xf32>
    %cst_21 = arith.constant dense<0.000000e+00> : vector<4x80xf32>
    %39 = tpu.matmul %10, %38, %cst_21 {dimension_numbers = #tpu.dot_dimension_numbers<[1], [0], [0], [1], [0, 0, 1, 1], [], []>} : vector<4x16xf32>, vector<16x80xf32>, vector<4x80xf32> -> vector<4x80xf32>
    %c3 = arith.constant 3 : index
    %c0_22 = arith.constant 0 : index
    %40 = vector.load %arg11[%c3, %c0_22] : memref<8x512xf32, #tpu.memory_space<vmem>>, vector<1x80xf32>
    %41 = vector.broadcast %40 : vector<1x80xf32> to vector<4x80xf32>
    %42 = arith.addf %39, %41 : vector<4x80xf32>
    %cst_23 = arith.constant dense<0.000000e+00> : vector<10x80xf32>
    %43 = tpu.matmul %32, %42, %cst_23 {dimension_numbers = #tpu.dot_dimension_numbers<[1], [0], [0], [1], [0, 0, 1, 1], [], []>} : vector<10x4xf32>, vector<4x80xf32>, vector<10x80xf32> -> vector<10x80xf32>
    %44 = arith.addf %37, %43 : vector<10x80xf32>
    %cst_24 = arith.constant 0.000000e+00 : f32
    %45 = vector.broadcast %cst_24 : f32 to vector<10x80xf32>
    %46 = arith.cmpf ogt, %44, %45 : vector<10x80xf32>
    %cst_25 = arith.constant 2.000000e-01 : f32
    %47 = vector.broadcast %cst_25 : f32 to vector<10x80xf32>
    %48 = arith.mulf %47, %44 : vector<10x80xf32>
    %49 = arith.select %46, %44, %48 : vector<10x80xi1>, vector<10x80xf32>
    %c0_26 = arith.constant 0 : index
    %c0_27 = arith.constant 0 : index
    %50 = vector.load %arg7[%c0_26, %c0_27] : memref<5x80xf32, #tpu.memory_space<vmem>>, vector<5x80xf32>
    %cst_28 = arith.constant dense<0.000000e+00> : vector<10x5xf32>
    %51 = tpu.matmul %49, %50, %cst_28 {dimension_numbers = #tpu.dot_dimension_numbers<[1], [1], [0], [0], [0, 0, 1, 0], [], []>} : vector<10x80xf32>, vector<5x80xf32>, vector<10x5xf32> -> vector<10x5xf32>
    %cst_29 = arith.constant dense<0.000000e+00> : vector<5x10xf32>
    %52 = tpu.matmul %50, %49, %cst_29 {dimension_numbers = #tpu.dot_dimension_numbers<[1], [1], [0], [0], [0, 0, 1, 0], [], []>} : vector<5x80xf32>, vector<10x80xf32>, vector<5x10xf32> -> vector<5x10xf32>
    %cst_30 = arith.constant 1.000000e+00 : f32
    %53 = vector.broadcast %cst_30 : f32 to vector<4x10xf32>
    %54 = arith.subf %53, %25 : vector<4x10xf32>
    %cst_31 = arith.constant -1.000000e+30 : f32
    %55 = vector.broadcast %cst_31 : f32 to vector<4x10xf32>
    %56 = arith.mulf %54, %55 : vector<4x10xf32>
    %57 = vector.extract_strided_slice %52 {offsets = [0, 0], sizes = [1, 10], strides = [1, 1]} : vector<5x10xf32> to vector<1x10xf32>
    %58 = vector.broadcast %57 : vector<1x10xf32> to vector<4x10xf32>
    %59 = arith.mulf %25, %58 : vector<4x10xf32>
    %60 = arith.addf %59, %56 : vector<4x10xf32>
    %cst_32 = arith.constant dense<0xFF800000> : vector<4xf32>
    %61 = vector.multi_reduction <maximumf>, %60, %cst_32 [1] : vector<4x10xf32> to vector<4xf32>
    %62 = vector.shape_cast %61 : vector<4xf32> to vector<4x1xf32>
    %63 = vector.extract_strided_slice %52 {offsets = [1, 0], sizes = [1, 10], strides = [1, 1]} : vector<5x10xf32> to vector<1x10xf32>
    %64 = vector.broadcast %63 : vector<1x10xf32> to vector<4x10xf32>
    %65 = arith.mulf %25, %64 : vector<4x10xf32>
    %66 = arith.addf %65, %56 : vector<4x10xf32>
    %cst_33 = arith.constant dense<0xFF800000> : vector<4xf32>
    %67 = vector.multi_reduction <maximumf>, %66, %cst_33 [1] : vector<4x10xf32> to vector<4xf32>
    %68 = vector.shape_cast %67 : vector<4xf32> to vector<4x1xf32>
    %69 = vector.extract_strided_slice %52 {offsets = [2, 0], sizes = [1, 10], strides = [1, 1]} : vector<5x10xf32> to vector<1x10xf32>
    %70 = vector.broadcast %69 : vector<1x10xf32> to vector<4x10xf32>
    %71 = arith.mulf %25, %70 : vector<4x10xf32>
    %72 = arith.addf %71, %56 : vector<4x10xf32>
    %cst_34 = arith.constant dense<0xFF800000> : vector<4xf32>
    %73 = vector.multi_reduction <maximumf>, %72, %cst_34 [1] : vector<4x10xf32> to vector<4xf32>
    %74 = vector.shape_cast %73 : vector<4xf32> to vector<4x1xf32>
    %75 = vector.extract_strided_slice %52 {offsets = [3, 0], sizes = [1, 10], strides = [1, 1]} : vector<5x10xf32> to vector<1x10xf32>
    %76 = vector.broadcast %75 : vector<1x10xf32> to vector<4x10xf32>
    %77 = arith.mulf %25, %76 : vector<4x10xf32>
    %78 = arith.addf %77, %56 : vector<4x10xf32>
    %cst_35 = arith.constant dense<0xFF800000> : vector<4xf32>
    %79 = vector.multi_reduction <maximumf>, %78, %cst_35 [1] : vector<4x10xf32> to vector<4xf32>
    %80 = vector.shape_cast %79 : vector<4xf32> to vector<4x1xf32>
    %81 = vector.extract_strided_slice %52 {offsets = [4, 0], sizes = [1, 10], strides = [1, 1]} : vector<5x10xf32> to vector<1x10xf32>
    %82 = vector.broadcast %81 : vector<1x10xf32> to vector<4x10xf32>
    %83 = arith.mulf %25, %82 : vector<4x10xf32>
    %84 = arith.addf %83, %56 : vector<4x10xf32>
    %cst_36 = arith.constant dense<0xFF800000> : vector<4xf32>
    %85 = vector.multi_reduction <maximumf>, %84, %cst_36 [1] : vector<4x10xf32> to vector<4xf32>
    %86 = vector.shape_cast %85 : vector<4xf32> to vector<4x1xf32>
    %87 = tpu.concatenate %62, %68, %74, %80, %86 in 1 : vector<4x1xf32>, vector<4x1xf32>, vector<4x1xf32>, vector<4x1xf32>, vector<4x1xf32> -> vector<4x5xf32>
    %cst_37 = arith.constant dense<0.000000e+00> : vector<10x5xf32>
    %88 = tpu.matmul %32, %87, %cst_37 {dimension_numbers = #tpu.dot_dimension_numbers<[1], [0], [0], [1], [0, 0, 1, 1], [], []>} : vector<10x4xf32>, vector<4x5xf32>, vector<10x5xf32> -> vector<10x5xf32>
    %89 = vector.broadcast %18 : i32 to vector<10x1xi32>
    %90 = arith.cmpi sge, %3, %89 : vector<10x1xi32>
    %c4_i32_38 = arith.constant 4 : i32
    %91 = arith.addi %18, %c4_i32_38 : i32
    %92 = vector.broadcast %91 : i32 to vector<10x1xi32>
    %93 = arith.cmpi slt, %3, %92 : vector<10x1xi32>
    %94 = arith.andi %90, %93 : vector<10x1xi1>
    %95 = arith.subf %51, %88 : vector<10x5xf32>
    %cst_39 = arith.constant -1.000000e+30 : f32
    %96 = vector.shape_cast %94 : vector<10x1xi1> to vector<10x1xi1>
    %97 = vector.broadcast %96 : vector<10x1xi1> to vector<10x5xi1>
    %98 = vector.broadcast %cst_39 : f32 to vector<10x5xf32>
    %99 = arith.select %97, %95, %98 : vector<10x5xi1>, vector<10x5xf32>
    %100 = math.exp %99 : vector<10x5xf32>
    %cst_40 = arith.constant dense<0.000000e+00> : vector<4x5xf32>
    %101 = tpu.matmul %25, %100, %cst_40 {dimension_numbers = #tpu.dot_dimension_numbers<[1], [0], [0], [1], [0, 0, 1, 1], [], []>} : vector<4x10xf32>, vector<10x5xf32>, vector<4x5xf32> -> vector<4x5xf32>
    %cst_41 = arith.constant dense<0.000000e+00> : vector<10x5xf32>
    %102 = tpu.matmul %32, %101, %cst_41 {dimension_numbers = #tpu.dot_dimension_numbers<[1], [0], [0], [1], [0, 0, 1, 1], [], []>} : vector<10x4xf32>, vector<4x5xf32>, vector<10x5xf32> -> vector<10x5xf32>
    %cst_42 = arith.constant 9.99999968E-21 : f32
    %103 = vector.broadcast %cst_42 : f32 to vector<10x5xf32>
    %104 = arith.addf %102, %103 : vector<10x5xf32>
    %105 = arith.divf %100, %104 : vector<10x5xf32>
    %106 = tpu.iota {dimensions = array<i32: 1>} : vector<5x80xi32>
    %107 = tpu.iota {dimensions = array<i32: 0>} : vector<5x80xi32>
    %c16_i32 = arith.constant 16 : i32
    %108 = vector.broadcast %c16_i32 : i32 to vector<5x80xi32>
    %109 = arith.muli %107, %108 : vector<5x80xi32>
    %110 = arith.cmpi sge, %106, %109 : vector<5x80xi32>
    %c1_i32 = arith.constant 1 : i32
    %111 = vector.broadcast %c1_i32 : i32 to vector<5x80xi32>
    %112 = arith.addi %107, %111 : vector<5x80xi32>
    %c16_i32_43 = arith.constant 16 : i32
    %113 = vector.broadcast %c16_i32_43 : i32 to vector<5x80xi32>
    %114 = arith.muli %112, %113 : vector<5x80xi32>
    %115 = arith.cmpi slt, %106, %114 : vector<5x80xi32>
    %116 = arith.andi %110, %115 : vector<5x80xi1>
    %117 = arith.extui %116 : vector<5x80xi1> to vector<5x80xi32>
    %118 = arith.sitofp %117 : vector<5x80xi32> to vector<5x80xf32>
    %cst_44 = arith.constant dense<0.000000e+00> : vector<10x80xf32>
    %119 = tpu.matmul %105, %118, %cst_44 {dimension_numbers = #tpu.dot_dimension_numbers<[1], [0], [0], [1], [0, 0, 1, 1], [], []>} : vector<10x5xf32>, vector<5x80xf32>, vector<10x80xf32> -> vector<10x80xf32>
    %120 = arith.mulf %119, %37 : vector<10x80xf32>
    %cst_45 = arith.constant dense<0.000000e+00> : vector<4x80xf32>
    %121 = tpu.matmul %25, %120, %cst_45 {dimension_numbers = #tpu.dot_dimension_numbers<[1], [0], [0], [1], [0, 0, 1, 1], [], []>} : vector<4x10xf32>, vector<10x80xf32>, vector<4x80xf32> -> vector<4x80xf32>
    %c4 = arith.constant 4 : index
    %c0_46 = arith.constant 0 : index
    %122 = vector.load %arg11[%c4, %c0_46] : memref<8x512xf32, #tpu.memory_space<vmem>>, vector<1x80xf32>
    %123 = vector.broadcast %122 : vector<1x80xf32> to vector<4x80xf32>
    %124 = arith.addf %121, %123 : vector<4x80xf32>
    %cst_47 = arith.constant 0.000000e+00 : f32
    %125 = vector.broadcast %cst_47 : f32 to vector<4x80xf32>
    %126 = arith.maximumf %124, %125 : vector<4x80xf32>
    %c0_48 = arith.constant 0 : index
    %c0_49 = arith.constant 0 : index
    %127 = vector.load %arg8[%c0_48, %c0_49] : memref<96x512xf32, #tpu.memory_space<vmem>>, vector<16x512xf32>
    %cst_50 = arith.constant dense<0.000000e+00> : vector<4x512xf32>
    %128 = tpu.matmul %10, %127, %cst_50 {dimension_numbers = #tpu.dot_dimension_numbers<[1], [0], [0], [1], [0, 0, 1, 1], [], []>} : vector<4x16xf32>, vector<16x512xf32>, vector<4x512xf32> -> vector<4x512xf32>
    %c16_51 = arith.constant 16 : index
    %c0_52 = arith.constant 0 : index
    %129 = vector.load %arg8[%c16_51, %c0_52] : memref<96x512xf32, #tpu.memory_space<vmem>>, vector<80x512xf32>
    %cst_53 = arith.constant dense<0.000000e+00> : vector<4x512xf32>
    %130 = tpu.matmul %126, %129, %cst_53 {dimension_numbers = #tpu.dot_dimension_numbers<[1], [0], [0], [1], [0, 0, 1, 1], [], []>} : vector<4x80xf32>, vector<80x512xf32>, vector<4x512xf32> -> vector<4x512xf32>
    %131 = arith.addf %128, %130 : vector<4x512xf32>
    %c5 = arith.constant 5 : index
    %c0_54 = arith.constant 0 : index
    %132 = vector.load %arg11[%c5, %c0_54] : memref<8x512xf32, #tpu.memory_space<vmem>>, vector<1x512xf32>
    %133 = vector.broadcast %132 : vector<1x512xf32> to vector<4x512xf32>
    %134 = arith.addf %131, %133 : vector<4x512xf32>
    %cst_55 = arith.constant 0.000000e+00 : f32
    %135 = vector.broadcast %cst_55 : f32 to vector<4x512xf32>
    %136 = arith.maximumf %134, %135 : vector<4x512xf32>
    %c0_56 = arith.constant 0 : index
    %c0_57 = arith.constant 0 : index
    %137 = vector.load %arg9[%c0_56, %c0_57] : memref<512x256xf32, #tpu.memory_space<vmem>>, vector<512x256xf32>
    %cst_58 = arith.constant dense<0.000000e+00> : vector<4x256xf32>
    %138 = tpu.matmul %136, %137, %cst_58 {dimension_numbers = #tpu.dot_dimension_numbers<[1], [0], [0], [1], [0, 0, 1, 1], [], []>} : vector<4x512xf32>, vector<512x256xf32>, vector<4x256xf32> -> vector<4x256xf32>
    %c6 = arith.constant 6 : index
    %c0_59 = arith.constant 0 : index
    %139 = vector.load %arg11[%c6, %c0_59] : memref<8x512xf32, #tpu.memory_space<vmem>>, vector<1x256xf32>
    %140 = vector.broadcast %139 : vector<1x256xf32> to vector<4x256xf32>
    %141 = arith.addf %138, %140 : vector<4x256xf32>
    %cst_60 = arith.constant 0.000000e+00 : f32
    %142 = vector.broadcast %cst_60 : f32 to vector<4x256xf32>
    %143 = arith.maximumf %141, %142 : vector<4x256xf32>
    %c0_61 = arith.constant 0 : index
    %c0_62 = arith.constant 0 : index
    %144 = vector.load %arg10[%c0_61, %c0_62] : memref<256x4xf32, #tpu.memory_space<vmem>>, vector<256x4xf32>
    %cst_63 = arith.constant dense<0.000000e+00> : vector<4x4xf32>
    %145 = tpu.matmul %143, %144, %cst_63 {dimension_numbers = #tpu.dot_dimension_numbers<[1], [0], [0], [1], [0, 0, 1, 1], [], []>} : vector<4x256xf32>, vector<256x4xf32>, vector<4x4xf32> -> vector<4x4xf32>
    %c7 = arith.constant 7 : index
    %c0_64 = arith.constant 0 : index
    %146 = vector.load %arg11[%c7, %c0_64] : memref<8x512xf32, #tpu.memory_space<vmem>>, vector<1x4xf32>
    %147 = vector.broadcast %146 : vector<1x4xf32> to vector<4x4xf32>
    %148 = arith.addf %145, %147 : vector<4x4xf32>
    %149 = vector.extract_strided_slice %148 {offsets = [0, 0], sizes = [4, 3], strides = [1, 1]} : vector<4x4xf32> to vector<4x3xf32>
    %150 = vector.extract_strided_slice %148 {offsets = [0, 3], sizes = [4, 1], strides = [1, 1]} : vector<4x4xf32> to vector<4x1xf32>
    %cst_65 = arith.constant dense<0.000000e+00> : vector<4xf32>
    %151 = vector.multi_reduction <add>, %149, %cst_65 [1] : vector<4x3xf32> to vector<4xf32>
    %152 = vector.shape_cast %151 : vector<4xf32> to vector<4x1xf32>
    %cst_66 = arith.constant 3.000000e+00 : f32
    %153 = vector.broadcast %cst_66 : f32 to vector<4x1xf32>
    %154 = arith.divf %152, %153 : vector<4x1xf32>
    %155 = vector.broadcast %154 : vector<4x1xf32> to vector<4x3xf32>
    %156 = arith.subf %149, %155 : vector<4x3xf32>
    %157 = vector.broadcast %150 : vector<4x1xf32> to vector<4x3xf32>
    %158 = arith.addf %157, %156 : vector<4x3xf32>
    %c0_67 = arith.constant 0 : index
    %c0_68 = arith.constant 0 : index
    %159 = vector.load %arg12[%c0_67, %c0_68] : memref<4x3xf32, #tpu.memory_space<vmem>>, vector<4x3xf32>
    tpu.vector_store %arg12[%c0_67, %c0_68], %158 {strides = array<i32>} : memref<4x3xf32, #tpu.memory_space<vmem>>, vector<4x3xf32>,
    return
  }
  func.func @transform_0(%arg0: i32) -> (i32, i32) {
    %c0_i32 = arith.constant 0 : i32
    %c0_i32_0 = arith.constant 0 : i32
    return %arg0, %c0_i32 : i32, i32
  }
  func.func @transform_1(%arg0: i32) -> (i32, i32) {
    %c0_i32 = arith.constant 0 : i32
    %c0_i32_0 = arith.constant 0 : i32
    %c0_i32_1 = arith.constant 0 : i32
    return %c0_i32, %c0_i32_0 : i32, i32
  }
  func.func @transform_2(%arg0: i32) -> (i32, i32) {
    %c0_i32 = arith.constant 0 : i32
    %c0_i32_0 = arith.constant 0 : i32
    %c0_i32_1 = arith.constant 0 : i32
    return %c0_i32, %c0_i32_0 : i32, i32
  }
  func.func @transform_3(%arg0: i32) -> (i32, i32) {
    %c0_i32 = arith.constant 0 : i32
    %c0_i32_0 = arith.constant 0 : i32
    %c0_i32_1 = arith.constant 0 : i32
    return %c0_i32, %c0_i32_0 : i32, i32
  }
  func.func @transform_4(%arg0: i32) -> (i32, i32) {
    %c0_i32 = arith.constant 0 : i32
    %c0_i32_0 = arith.constant 0 : i32
    %c0_i32_1 = arith.constant 0 : i32
    return %c0_i32, %c0_i32_0 : i32, i32
  }
  func.func @transform_5(%arg0: i32) -> (i32, i32) {
    %c0_i32 = arith.constant 0 : i32
    %c0_i32_0 = arith.constant 0 : i32
    %c0_i32_1 = arith.constant 0 : i32
    return %c0_i32, %c0_i32_0 : i32, i32
  }
  func.func @transform_6(%arg0: i32) -> (i32, i32) {
    %c0_i32 = arith.constant 0 : i32
    %c0_i32_0 = arith.constant 0 : i32
    %c0_i32_1 = arith.constant 0 : i32
    return %c0_i32, %c0_i32_0 : i32, i32
  }
  func.func @transform_7(%arg0: i32) -> (i32, i32) {
    %c0_i32 = arith.constant 0 : i32
    %c0_i32_0 = arith.constant 0 : i32
    %c0_i32_1 = arith.constant 0 : i32
    return %c0_i32, %c0_i32_0 : i32, i32
  }
  func.func @transform_8(%arg0: i32) -> (i32, i32) {
    %c0_i32 = arith.constant 0 : i32
    %c0_i32_0 = arith.constant 0 : i32
    %c0_i32_1 = arith.constant 0 : i32
    return %c0_i32, %c0_i32_0 : i32, i32
  }
  func.func @transform_9(%arg0: i32) -> (i32, i32) {
    %c0_i32 = arith.constant 0 : i32
    %c0_i32_0 = arith.constant 0 : i32
    %c0_i32_1 = arith.constant 0 : i32
    return %c0_i32, %c0_i32_0 : i32, i32
  }
  func.func @transform_10(%arg0: i32) -> (i32, i32) {
    %c0_i32 = arith.constant 0 : i32
    %c0_i32_0 = arith.constant 0 : i32
    %c0_i32_1 = arith.constant 0 : i32
    return %c0_i32, %c0_i32_0 : i32, i32
  }
  func.func @transform_11(%arg0: i32) -> (i32, i32) {
    %c0_i32 = arith.constant 0 : i32
    %c0_i32_0 = arith.constant 0 : i32
    return %arg0, %c0_i32 : i32, i32
  }
}

</mosaic_0001>

<llo_original>
// kernel: tpu_custom_call.1
$region0: #{tpu_custom_call.1}
  #allocation0 [shape = 'u32[]', space=smem, size = 0x4, offset = 0x4, fixed_abs, tag = 'smem constant byte address 0x4 - core index']
  #allocation1 [shape = 'u32[144,128]{1,0:T(1,128)}', space=vmem, size = 0x12000, scoped, tag = 'internal scratch']
  %s0 = inlined_call_operand.hbm [shape: f32[4,27], index: 0, kind: input, shape index: {}]
  %s1 = inlined_call_operand.hbm [shape: f32[10,23], index: 1, kind: input, shape index: {}]
  %s2 = inlined_call_operand.vmem [shape: s32[1,10], index: 2, kind: input, shape index: {}]
  %s3 = inlined_call_operand.vmem [shape: s32[10,1], index: 3, kind: input, shape index: {}]
  %s4 = inlined_call_operand.vmem [shape: f32[64,16], index: 4, kind: input, shape index: {}]
  %s5 = inlined_call_operand.hbm [shape: f32[32,80], index: 5, kind: input, shape index: {}]
  %s6 = inlined_call_operand.hbm [shape: f32[5,80], index: 6, kind: input, shape index: {}]
  %s7 = inlined_call_operand.vmem [shape: f32[96,512], index: 7, kind: input, shape index: {}]
  %s8 = inlined_call_operand.hbm [shape: f32[512,256], index: 8, kind: input, shape index: {}]
  %s9 = inlined_call_operand.vmem [shape: f32[256,4], index: 9, kind: input, shape index: {}]
  %s10 = inlined_call_operand.hbm [shape: f32[8,512], index: 10, kind: input, shape index: {}]
  %s11 = inlined_call_operand.hbm [shape: f32[4,3], index: 11, kind: output, shape index: {}]
  %s12 = sld [smem:[#allocation0]]
  $region78: #{tpu_custom_call.1} parent=0
    _
  %s14 = ssub.s32 1, %s12
  %s15 = scalar_select 0, %s14, %s12
  $region1: #{tpu_custom_call.1} parent=0
    #allocation2 [shape = 'u8[2048]{0}', space=vmem, size = 0x800, scoped, tag = 'input window, operand 0, single buffered']
    #allocation3 [shape = 's32[1]{0}', space=sflag, size = 0x4, scoped, tag = 'scoped memory for tpu_custom_call.1']
    #allocation4 [shape = 's32[1]{0}', space=sflag, size = 0x4, scoped, tag = 'scoped memory for tpu_custom_call.1']
    #allocation5 [shape = 'u8[8192]{0}', space=vmem, size = 0x2000, scoped, tag = 'input window, operand 1, single buffered']
    #allocation6 [shape = 's32[1]{0}', space=sflag, size = 0x4, scoped, tag = 'scoped memory for tpu_custom_call.1']
    #allocation7 [shape = 'u8[16384]{0}', space=vmem, size = 0x4000, scoped, tag = 'input window, operand 5, single buffered']
    #allocation8 [shape = 'u8[4096]{0}', space=vmem, size = 0x1000, scoped, tag = 'input window, operand 6, single buffered']
    #allocation9 [shape = 's32[1]{0}', space=sflag, size = 0x4, scoped, tag = 'scoped memory for tpu_custom_call.1']
    #allocation10 [shape = 'u8[524288]{0}', space=vmem, size = 0x80000, scoped, tag = 'input window, operand 8, single buffered']
    #allocation11 [shape = 'u8[16384]{0}', space=vmem, size = 0x4000, scoped, tag = 'input window, operand 10, single buffered']
    #allocation12 [shape = 's32[1]{0}', space=sflag, size = 0x4, scoped, tag = 'scoped memory for tpu_custom_call.1']
    #allocation13 [shape = 'u8[2048]{0}', space=vmem, size = 0x800, scoped, tag = 'output window, operand 0, single buffered']
    %16 = vsyncpa [#allocation3], 0
    %17 = vsyncpa [#allocation6], 0
    %18 = vsyncpa [#allocation9], 0
    %19 = vsyncpa [#allocation12], 0
    %20 = vsyncpa [#allocation4], 0
    // Predicated region
    $region2: #{tpu_custom_call.1} parent=1 // pred_check
      _
    $region3: #{tpu_custom_call.1} parent=1 // pred_check_branch
      %22 = sbr.rel (0) target = $region5
    $region4: #{tpu_custom_call.1} parent=1 // pred_region
      %s24 = ssub.s32 64, 64
      %25 = vsyncadd [#allocation3], %s24
      %s27 = sshll.u32 [#allocation2], 4
      %s28 = int_to_ptr.vmem [resolvable:$true] %s27
      %30 = dma.hbm_to_vmem [thread:$0]  %s0, 64, %s28, [#allocation3]
    $region5: #{tpu_custom_call.1} parent=1 // pred_fallthru
      _
    // Predicated region
    $region6: #{tpu_custom_call.1} parent=1 // pred_check
      _
    $region7: #{tpu_custom_call.1} parent=1 // pred_check_branch
      %32 = sbr.rel (0) target = $region9
    $region8: #{tpu_custom_call.1} parent=1 // pred_region
      %s34 = ssub.s32 256, 256
      %35 = vsyncadd [#allocation6], %s34
      %s36 = sshll.u32 [#allocation5], 4
      %s37 = int_to_ptr.vmem [resolvable:$true] %s36
      %42 = dma.hbm_to_vmem [thread:$0]  %s1, 256, %s37, [#allocation6], 128, 128, 8
    $region9: #{tpu_custom_call.1} parent=1 // pred_fallthru
      _
    // Predicated region
    $region10: #{tpu_custom_call.1} parent=1 // pred_check
      _
    $region11: #{tpu_custom_call.1} parent=1 // pred_check_branch
      %44 = sbr.rel (0) target = $region13
    $region12: #{tpu_custom_call.1} parent=1 // pred_region
      _
    $region13: #{tpu_custom_call.1} parent=1 // pred_fallthru
      _
    // Predicated region
    $region14: #{tpu_custom_call.1} parent=1 // pred_check
      _
    $region15: #{tpu_custom_call.1} parent=1 // pred_check_branch
      %46 = sbr.rel (0) target = $region17
    $region16: #{tpu_custom_call.1} parent=1 // pred_region
      _
    $region17: #{tpu_custom_call.1} parent=1 // pred_fallthru
      _
    // Predicated region
    $region18: #{tpu_custom_call.1} parent=1 // pred_check
      _
    $region19: #{tpu_custom_call.1} parent=1 // pred_check_branch
      %48 = sbr.rel (0) target = $region21
    $region20: #{tpu_custom_call.1} parent=1 // pred_region
      _
    $region21: #{tpu_custom_call.1} parent=1 // pred_fallthru
      _
    // Predicated region
    $region22: #{tpu_custom_call.1} parent=1 // pred_check
      _
    $region23: #{tpu_custom_call.1} parent=1 // pred_check_branch
      %50 = sbr.rel (0) target = $region25
    $region24: #{tpu_custom_call.1} parent=1 // pred_region
      %s52 = ssub.s32 512, 512
      %53 = vsyncadd [#allocation6], %s52
      %s54 = sshll.u32 [#allocation7], 4
      %s55 = int_to_ptr.vmem [resolvable:$true] %s54
      %60 = dma.hbm_to_vmem [thread:$0]  %s5, 512, %s55, [#allocation6], 128, 128, 8
    $region25: #{tpu_custom_call.1} parent=1 // pred_fallthru
      _
    // Predicated region
    $region26: #{tpu_custom_call.1} parent=1 // pred_check
      _
    $region27: #{tpu_custom_call.1} parent=1 // pred_check_branch
      %62 = sbr.rel (0) target = $region29
    $region28: #{tpu_custom_call.1} parent=1 // pred_region
      %s64 = ssub.s32 128, 128
      %65 = vsyncadd [#allocation9], %s64
      %s67 = sshll.u32 [#allocation8], 4
      %s68 = int_to_ptr.vmem [resolvable:$true] %s67
      %70 = dma.hbm_to_vmem [thread:$0]  %s6, 128, %s68, [#allocation9]
    $region29: #{tpu_custom_call.1} parent=1 // pred_fallthru
      _
    // Predicated region
    $region30: #{tpu_custom_call.1} parent=1 // pred_check
      _
    $region31: #{tpu_custom_call.1} parent=1 // pred_check_branch
      %72 = sbr.rel (0) target = $region33
    $region32: #{tpu_custom_call.1} parent=1 // pred_region
      _
    $region33: #{tpu_custom_call.1} parent=1 // pred_fallthru
      _
    // Predicated region
    $region34: #{tpu_custom_call.1} parent=1 // pred_check
      _
    $region35: #{tpu_custom_call.1} parent=1 // pred_check_branch
      %74 = sbr.rel (0) target = $region37
    $region36: #{tpu_custom_call.1} parent=1 // pred_region
      %s76 = ssub.s32 16384, 16384
      %77 = vsyncadd [#allocation9], %s76
      %s78 = sshll.u32 [#allocation10], 4
      %s79 = int_to_ptr.vmem [resolvable:$true] %s78
      %84 = dma.hbm_to_vmem [thread:$0]  %s8, 16384, %s79, [#allocation9], 256, 256, 16
    $region37: #{tpu_custom_call.1} parent=1 // pred_fallthru
      _
    // Predicated region
    $region38: #{tpu_custom_call.1} parent=1 // pred_check
      _
    $region39: #{tpu_custom_call.1} parent=1 // pred_check_branch
      %86 = sbr.rel (0) target = $region41
    $region40: #{tpu_custom_call.1} parent=1 // pred_region
      _
    $region41: #{tpu_custom_call.1} parent=1 // pred_fallthru
      _
    // Predicated region
    $region42: #{tpu_custom_call.1} parent=1 // pred_check
      _
    $region43: #{tpu_custom_call.1} parent=1 // pred_check_branch
      %88 = sbr.rel (0) target = $region45
    $region44: #{tpu_custom_call.1} parent=1 // pred_region
      %s90 = ssub.s32 512, 512
      %91 = vsyncadd [#allocation12], %s90
      %s93 = sshll.u32 [#allocation11], 4
      %s94 = int_to_ptr.vmem [resolvable:$true] %s93
      %96 = dma.hbm_to_vmem [thread:$0]  %s10, 512, %s94, [#allocation12]
    $region45: #{tpu_custom_call.1} parent=1 // pred_fallthru
      _
    // Predicated region
    $region46: #{tpu_custom_call.1} parent=1 // pred_check
      _
    $region47: #{tpu_custom_call.1} parent=1 // pred_check_branch
      %98 = sbr.rel (0) target = $region49
    $region48: #{tpu_custom_call.1} parent=1 // pred_region
      %99 = dma.done [#allocation3], 64
    $region49: #{tpu_custom_call.1} parent=1 // pred_fallthru
      _
    // Predicated region
    $region50: #{tpu_custom_call.1} parent=1 // pred_check
      _
    $region51: #{tpu_custom_call.1} parent=1 // pred_check_branch
      %101 = sbr.rel (0) target = $region53
    $region52: #{tpu_custom_call.1} parent=1 // pred_region
      %102 = dma.done [#allocation6], 256
    $region53: #{tpu_custom_call.1} parent=1 // pred_fallthru
      _
    // Predicated region
    $region54: #{tpu_custom_call.1} parent=1 // pred_check
      _
    $region55: #{tpu_custom_call.1} parent=1 // pred_check_branch
      %104 = sbr.rel (0) target = $region57
    $region56: #{tpu_custom_call.1} parent=1 // pred_region
      %105 = dma.done [#allocation6], 512
    $region57: #{tpu_custom_call.1} parent=1 // pred_fallthru
      _
    // Predicated region
    $region58: #{tpu_custom_call.1} parent=1 // pred_check
      _
    $region59: #{tpu_custom_call.1} parent=1 // pred_check_branch
      %107 = sbr.rel (0) target = $region61
    $region60: #{tpu_custom_call.1} parent=1 // pred_region
      %108 = dma.done [#allocation9], 128
    $region61: #{tpu_custom_call.1} parent=1 // pred_fallthru
      _
    // Predicated region
    $region62: #{tpu_custom_call.1} parent=1 // pred_check
      _
    $region63: #{tpu_custom_call.1} parent=1 // pred_check_branch
      %110 = sbr.rel (0) target = $region65
    $region64: #{tpu_custom_call.1} parent=1 // pred_region
      %111 = dma.done [#allocation9], 16384
    $region65: #{tpu_custom_call.1} parent=1 // pred_fallthru
      _
    // Predicated region
    $region66: #{tpu_custom_call.1} parent=1 // pred_check
      _
    $region67: #{tpu_custom_call.1} parent=1 // pred_check_branch
      %113 = sbr.rel (0) target = $region69
    $region68: #{tpu_custom_call.1} parent=1 // pred_region
      %114 = dma.done [#allocation12], 512
    $region69: #{tpu_custom_call.1} parent=1 // pred_fallthru
      _
    %v115 = vld [vmem:[#allocation2] sm:$0xf]
    %v116 = vld [vmem:[#allocation5] sm:$0xff]
    %v117 = vld [vmem:[#allocation5 + $0x8] sm:$0x3]
    %v118 = vld [vmem:[%s2] sm:$0x1]
    %v119 = vld [vmem:[%s3] sm:$0xff]
    %v120 = vld [vmem:[%s3 + $0x8] sm:$0x3]
    %v121 = vld [vmem:[%s4] sm:$0xff]
    %v122 = vld [vmem:[%s4 + $0x8] sm:$0xff]
    %v123 = vld [vmem:[%s4 + $0x10] sm:$0xff]
    %v124 = vld [vmem:[%s4 + $0x18] sm:$0x7]
    %v125 = vld [vmem:[#allocation11] ss:$0 sm:$0xff]
    %vm126 = vcmask 220160
    %v128 = vsel %vm126, %v115, 0
    %vm130 = vcmask 1042432
    %v132 = vsel %vm130, %v124, 0
    %134 = vmatprep.subr.mxu0 0.0
    %135 = vmatpush1.msra.mxu0 %v121
    %136 = vmatprep.subr.mxu0 0.0
    %137 = vmatpush1.msra.mxu0 %v122
    %138 = vmatprep.subr.mxu0 0.0
    %139 = vmatpush1.msra.mxu0 %v123
    %140 = vmatprep.subr.mxu0 0.0
    %141 = vmatpush1.msra.mxu0 %v132
    %142 = vmatprep.subr.mxu0 0.0
    %143 = vmatpush1.msra.mxu0 0.0
    %144 = vmatprep.subr.mxu0 0.0
    %145 = vmatpush1.msra.mxu0 0.0
    %146 = vmatprep.subr.mxu0 0.0
    %147 = vmatpush1.msra.mxu0 0.0
    %148 = vmatprep.subr.mxu0 0.0
    %149 = vmatpush1.msra.mxu0 0.0
    %150 = vmatprep.subr.mxu0 0.0
    %151 = vmatpush1.msra.mxu0 0.0
    %152 = vmatprep.subr.mxu0 0.0
    %153 = vmatpush1.msra.mxu0 0.0
    %154 = vmatprep.subr.mxu0 0.0
    %155 = vmatpush1.msra.mxu0 0.0
    %156 = vmatprep.subr.mxu0 0.0
    %157 = vmatpush1.msra.mxu0 0.0
    %158 = vmatprep.subr.mxu0 0.0
    %159 = vmatpush1.msra.mxu0 0.0
    %160 = vmatprep.subr.mxu0 0.0
    %161 = vmatpush1.msra.mxu0 0.0
    %162 = vmatprep.subr.mxu0 0.0
    %163 = vmatpush1.msra.mxu0 0.0
    %164 = vmatprep.subr.mxu0 0.0
    %165 = vmatpush1.msra.mxu0 0.0
    %166 = vmatprep.subr.mxu0 0.0
    %167 = vmatpush1.msra.mxu0 0.0
    %168 = vmatprep.subr.mxu0 0.0
    %169 = vmatpush1.msra.mxu0 0.0
    %170 = vmatprep.subr.mxu0 0.0
    %171 = vmatpush1.msra.mxu0 0.0
    %172 = vmatprep.subr.mxu0 0.0
    %173 = vmatpush1.msra.mxu0 0.0
    %174 = vmatprep.subr.mxu0 0.0
    %175 = vmatpush1.msra.mxu0 0.0
    %176 = vmatprep.subr.mxu0 0.0
    %177 = vmatpush1.msra.mxu0 0.0
    %178 = vmatprep.subr.mxu0 0.0
    %179 = vmatpush1.msra.mxu0 0.0
    %180 = vmatprep.subr.mxu0 0.0
    %181 = vmatpush1.msra.mxu0 0.0
    %182 = vmatprep.subr.mxu0 0.0
    %183 = vmatpush1.msra.mxu0 0.0
    %184 = vmatprep.subr.mxu0 0.0
    %185 = vmatpush1.msra.mxu0 0.0
    %186 = vmatprep.subr.mxu0 0.0
    %187 = vmatpush1.msra.mxu0 0.0
    %188 = vmatprep.subr.mxu0 0.0
    %189 = vmatpush1.msra.mxu0 0.0
    %190 = vmatprep.subr.mxu0 0.0
    %191 = vmatpush1.msra.mxu0 0.0
    %192 = vmatprep.subr.mxu0 0.0
    %193 = vmatpush1.msra.mxu0 0.0
    %194 = vmatprep.subr.mxu0 0.0
    %195 = vmatpush1.msra.mxu0 0.0
    %196 = vmatprep.subr.mxu0 0.0
    %197 = vmatpush1.msra.mxu0 0.0
    %198 = vmatprep.mubr.f32.mxu0 0.0
    %199 = vmatmul.mubr.f32.gmra.mrb[0].mxu0 %v128
    %v200 = vpop.f32.mrb[0].mxu0
    %v201 = vadd.f32 %v125, %v200
    %v202 = vpop.f32.mrb[0].mxu0
    %203 = vdwg.mxu0
    %v204 = vmax.f32 %v201, 0.0
    %v205 = vld [vmem:[%s4 + $0x20] sm:$0xff]
    %v206 = vld [vmem:[%s4 + $0x28] sm:$0xff]
    %v207 = vld [vmem:[%s4 + $0x30] sm:$0x7f]
    %v208 = vld [vmem:[#allocation11 + $0x1] ss:$0 sm:$0xff]
    %vm209 = vcmask 187392
    %v211 = vsel %vm209, %v116, 0
    %v214 = vsel %vm209, %v117, 0
    %vm216 = vcmask 1046528
    %v218 = vsel %vm216, %v207, 0
    %220 = vmatprep.subr.mxu0 0.0
    %221 = vmatpush1.msra.mxu0 %v205
    %222 = vmatprep.subr.mxu0 0.0
    %223 = vmatpush1.msra.mxu0 %v206
    %224 = vmatprep.subr.mxu0 0.0
    %225 = vmatpush1.msra.mxu0 %v218
    %226 = vmatprep.subr.mxu0 0.0
    %227 = vmatpush1.msra.mxu0 0.0
    %228 = vmatprep.subr.mxu0 0.0
    %229 = vmatpush1.msra.mxu0 0.0
    %230 = vmatprep.subr.mxu0 0.0
    %231 = vmatpush1.msra.mxu0 0.0
    %232 = vmatprep.subr.mxu0 0.0
    %233 = vmatpush1.msra.mxu0 0.0
    %234 = vmatprep.subr.mxu0 0.0
    %235 = vmatpush1.msra.mxu0 0.0
    %236 = vmatprep.subr.mxu0 0.0
    %237 = vmatpush1.msra.mxu0 0.0
    %238 = vmatprep.subr.mxu0 0.0
    %239 = vmatpush1.msra.mxu0 0.0
    %240 = vmatprep.subr.mxu0 0.0
    %241 = vmatpush1.msra.mxu0 0.0
    %242 = vmatprep.subr.mxu0 0.0
    %243 = vmatpush1.msra.mxu0 0.0
    %244 = vmatprep.subr.mxu0 0.0
    %245 = vmatpush1.msra.mxu0 0.0
    %246 = vmatprep.subr.mxu0 0.0
    %247 = vmatpush1.msra.mxu0 0.0
    %248 = vmatprep.subr.mxu0 0.0
    %249 = vmatpush1.msra.mxu0 0.0
    %250 = vmatprep.subr.mxu0 0.0
    %251 = vmatpush1.msra.mxu0 0.0
    %252 = vmatprep.subr.mxu0 0.0
    %253 = vmatpush1.msra.mxu0 0.0
    %254 = vmatprep.subr.mxu0 0.0
    %255 = vmatpush1.msra.mxu0 0.0
    %256 = vmatprep.subr.mxu0 0.0
    %257 = vmatpush1.msra.mxu0 0.0
    %258 = vmatprep.subr.mxu0 0.0
    %259 = vmatpush1.msra.mxu0 0.0
    %260 = vmatprep.subr.mxu0 0.0
    %261 = vmatpush1.msra.mxu0 0.0
    %262 = vmatprep.subr.mxu0 0.0
    %263 = vmatpush1.msra.mxu0 0.0
    %264 = vmatprep.subr.mxu0 0.0
    %265 = vmatpush1.msra.mxu0 0.0
    %266 = vmatprep.subr.mxu0 0.0
    %267 = vmatpush1.msra.mxu0 0.0
    %268 = vmatprep.subr.mxu0 0.0
    %269 = vmatpush1.msra.mxu0 0.0
    %270 = vmatprep.subr.mxu0 0.0
    %271 = vmatpush1.msra.mxu0 0.0
    %272 = vmatprep.subr.mxu0 0.0
    %273 = vmatpush1.msra.mxu0 0.0
    %274 = vmatprep.subr.mxu0 0.0
    %275 = vmatpush1.msra.mxu0 0.0
    %276 = vmatprep.subr.mxu0 0.0
    %277 = vmatpush1.msra.mxu0 0.0
    %278 = vmatprep.subr.mxu0 0.0
    %279 = vmatpush1.msra.mxu0 0.0
    %280 = vmatprep.subr.mxu0 0.0
    %281 = vmatpush1.msra.mxu0 0.0
    %282 = vmatprep.subr.mxu0 0.0
    %283 = vmatpush1.msra.mxu0 0.0
    %284 = vmatprep.mubr.f32.mxu0 0.0
    %285 = vmatmul.mubr.f32.gmra.mrb[0].mxu0 %v211
    %v286 = vpop.f32.mrb[0].mxu0
    %v287 = vadd.f32 %v208, %v286
    %v288 = vpop.f32.mrb[0].mxu0
    %289 = vmatprep.mubr.f32.mxu0 0.0
    %290 = vmatmul.mubr.f32.gmra.mrb[0].mxu0 %v214
    %v291 = vpop.f32.mrb[0].mxu0
    %v292 = vadd.f32 %v208, %v291
    %v293 = vpop.f32.mrb[0].mxu0
    %294 = vdwg.mxu0
    %v295 = vmax.f32 %v287, 0.0
    %v296 = vmax.f32 %v292, 0.0
    %s297 = smul.u32 0, 4
    %v298 = vlaneseq
    %v299 = vshrl.u32 %v298, 7
    %v300 = vstv %s297
    %v301 = vadd.s32 %v299, %v300
    %v302 = vlaneseq
    %v303 = vshrl.u32 %v302, 7
    %v304 = vsub.s32 0, %v303
    %v305 = vrot.slane %v118, %v304
    %vm306 = vcmp.eq.s32.totalorder %v301, %v305
    %v307 = vsel %vm306, 1, 0
    %v308 = vcvt.s32.f32 %v307
    %v309 = vlaneseq
    %v310 = vand.u32 %v309, 127
    %v311 = vadd.s32 %v310, %v300
    %312 = vset.pattern.permute.xlu0 0
    %313 = vperm.xlu0 %312, %v119
    %v314 = vpop.permute.xlu0 %313
    %315 = vset.pattern.permute.xlu0 0
    %316 = vperm.xlu0 %315, %v120
    %v317 = vpop.permute.xlu0 %316
    %vm318 = vcmp.eq.s32.totalorder %v311, %v314
    %vm319 = vcmp.eq.s32.totalorder %v311, %v317
    %v320 = vsel %vm318, 1, 0
    %v321 = vsel %vm319, 1, 0
    %v322 = vcvt.s32.f32 %v320
    %v323 = vcvt.s32.f32 %v321
    %v324 = vld [vmem:[#allocation7] sm:$0xff]
    %v325 = vld [vmem:[#allocation7 + $0x8] sm:$0xff]
    %v326 = vld [vmem:[#allocation11 + $0x2] ss:$0 sm:$0xff]
    %vm327 = vcmask 130048
    %v329 = vsel %vm327, %v295, 0
    %v332 = vsel %vm327, %v296, 0
    %334 = vmatprep.subr.mxu0 0.0
    %335 = vmatpush1.msra.mxu0 %v324
    %336 = vmatprep.subr.mxu0 0.0
    %337 = vmatpush1.msra.mxu0 %v325
    %338 = vmatprep.subr.mxu0 0.0
    %339 = vmatpush1.msra.mxu0 0.0
    %340 = vmatprep.subr.mxu0 0.0
    %341 = vmatpush1.msra.mxu0 0.0
    %342 = vmatprep.subr.mxu0 0.0
    %343 = vmatpush1.msra.mxu0 0.0
    %344 = vmatprep.subr.mxu0 0.0
    %345 = vmatpush1.msra.mxu0 0.0
    %346 = vmatprep.subr.mxu0 0.0
    %347 = vmatpush1.msra.mxu0 0.0
    %348 = vmatprep.subr.mxu0 0.0
    %349 = vmatpush1.msra.mxu0 0.0
    %350 = vmatprep.subr.mxu0 0.0
    %351 = vmatpush1.msra.mxu0 0.0
    %352 = vmatprep.subr.mxu0 0.0
    %353 = vmatpush1.msra.mxu0 0.0
    %354 = vmatprep.subr.mxu0 0.0
    %355 = vmatpush1.msra.mxu0 0.0
    %356 = vmatprep.subr.mxu0 0.0
    %357 = vmatpush1.msra.mxu0 0.0
    %358 = vmatprep.subr.mxu0 0.0
    %359 = vmatpush1.msra.mxu0 0.0
    %360 = vmatprep.subr.mxu0 0.0
    %361 = vmatpush1.msra.mxu0 0.0
    %362 = vmatprep.subr.mxu0 0.0
    %363 = vmatpush1.msra.mxu0 0.0
    %364 = vmatprep.subr.mxu0 0.0
    %365 = vmatpush1.msra.mxu0 0.0
    %366 = vmatprep.subr.mxu0 0.0
    %367 = vmatpush1.msra.mxu0 0.0
    %368 = vmatprep.subr.mxu0 0.0
    %369 = vmatpush1.msra.mxu0 0.0
    %370 = vmatprep.subr.mxu0 0.0
    %371 = vmatpush1.msra.mxu0 0.0
    %372 = vmatprep.subr.mxu0 0.0
    %373 = vmatpush1.msra.mxu0 0.0
    %374 = vmatprep.subr.mxu0 0.0
    %375 = vmatpush1.msra.mxu0 0.0
    %376 = vmatprep.subr.mxu0 0.0
    %377 = vmatpush1.msra.mxu0 0.0
    %378 = vmatprep.subr.mxu0 0.0
    %379 = vmatpush1.msra.mxu0 0.0
    %380 = vmatprep.subr.mxu0 0.0
    %381 = vmatpush1.msra.mxu0 0.0
    %382 = vmatprep.subr.mxu0 0.0
    %383 = vmatpush1.msra.mxu0 0.0
    %384 = vmatprep.subr.mxu0 0.0
    %385 = vmatpush1.msra.mxu0 0.0
    %386 = vmatprep.subr.mxu0 0.0
    %387 = vmatpush1.msra.mxu0 0.0
    %388 = vmatprep.subr.mxu0 0.0
    %389 = vmatpush1.msra.mxu0 0.0
    %390 = vmatprep.subr.mxu0 0.0
    %391 = vmatpush1.msra.mxu0 0.0
    %392 = vmatprep.subr.mxu0 0.0
    %393 = vmatpush1.msra.mxu0 0.0
    %394 = vmatprep.subr.mxu0 0.0
    %395 = vmatpush1.msra.mxu0 0.0
    %396 = vmatprep.subr.mxu0 0.0
    %397 = vmatpush1.msra.mxu0 0.0
    %398 = vmatprep.mubr.f32.mxu0 0.0
    %399 = vmatmul.mubr.f32.gmra.mrb[0].mxu0 %v329
    %v400 = vpop.f32.mrb[0].mxu0
    %v401 = vadd.f32 %v326, %v400
    %v402 = vpop.f32.mrb[0].mxu0
    %403 = vmatprep.mubr.f32.mxu0 0.0
    %404 = vmatmul.mubr.f32.gmra.mrb[0].mxu0 %v332
    %v405 = vpop.f32.mrb[0].mxu0
    %v406 = vadd.f32 %v326, %v405
    %v407 = vpop.f32.mrb[0].mxu0
    %408 = vdwg.mxu0
    %v409 = vld [vmem:[#allocation7 + $0x10] sm:$0xff]
    %v410 = vld [vmem:[#allocation7 + $0x18] sm:$0xff]
    %v411 = vld [vmem:[#allocation11 + $0x3] ss:$0 sm:$0xff]
    %v413 = vsel %vm327, %v204, 0
    %415 = vmatprep.subr.mxu0 0.0
    %416 = vmatpush1.msra.mxu0 %v409
    %417 = vmatprep.subr.mxu0 0.0
    %418 = vmatpush1.msra.mxu0 %v410
    %419 = vmatprep.subr.mxu0 0.0
    %420 = vmatpush1.msra.mxu0 0.0
    %421 = vmatprep.subr.mxu0 0.0
    %422 = vmatpush1.msra.mxu0 0.0
    %423 = vmatprep.subr.mxu0 0.0
    %424 = vmatpush1.msra.mxu0 0.0
    %425 = vmatprep.subr.mxu0 0.0
    %426 = vmatpush1.msra.mxu0 0.0
    %427 = vmatprep.subr.mxu0 0.0
    %428 = vmatpush1.msra.mxu0 0.0
    %429 = vmatprep.subr.mxu0 0.0
    %430 = vmatpush1.msra.mxu0 0.0
    %431 = vmatprep.subr.mxu0 0.0
    %432 = vmatpush1.msra.mxu0 0.0
    %433 = vmatprep.subr.mxu0 0.0
    %434 = vmatpush1.msra.mxu0 0.0
    %435 = vmatprep.subr.mxu0 0.0
    %436 = vmatpush1.msra.mxu0 0.0
    %437 = vmatprep.subr.mxu0 0.0
    %438 = vmatpush1.msra.mxu0 0.0
    %439 = vmatprep.subr.mxu0 0.0
    %440 = vmatpush1.msra.mxu0 0.0
    %441 = vmatprep.subr.mxu0 0.0
    %442 = vmatpush1.msra.mxu0 0.0
    %443 = vmatprep.subr.mxu0 0.0
    %444 = vmatpush1.msra.mxu0 0.0
    %445 = vmatprep.subr.mxu0 0.0
    %446 = vmatpush1.msra.mxu0 0.0
    %447 = vmatprep.subr.mxu0 0.0
    %448 = vmatpush1.msra.mxu0 0.0
    %449 = vmatprep.subr.mxu0 0.0
    %450 = vmatpush1.msra.mxu0 0.0
    %451 = vmatprep.subr.mxu0 0.0
    %452 = vmatpush1.msra.mxu0 0.0
    %453 = vmatprep.subr.mxu0 0.0
    %454 = vmatpush1.msra.mxu0 0.0
    %455 = vmatprep.subr.mxu0 0.0
    %456 = vmatpush1.msra.mxu0 0.0
    %457 = vmatprep.subr.mxu0 0.0
    %458 = vmatpush1.msra.mxu0 0.0
    %459 = vmatprep.subr.mxu0 0.0
    %460 = vmatpush1.msra.mxu0 0.0
    %461 = vmatprep.subr.mxu0 0.0
    %462 = vmatpush1.msra.mxu0 0.0
    %463 = vmatprep.subr.mxu0 0.0
    %464 = vmatpush1.msra.mxu0 0.0
    %465 = vmatprep.subr.mxu0 0.0
    %466 = vmatpush1.msra.mxu0 0.0
    %467 = vmatprep.subr.mxu0 0.0
    %468 = vmatpush1.msra.mxu0 0.0
    %469 = vmatprep.subr.mxu0 0.0
    %470 = vmatpush1.msra.mxu0 0.0
    %471 = vmatprep.subr.mxu0 0.0
    %472 = vmatpush1.msra.mxu0 0.0
    %473 = vmatprep.subr.mxu0 0.0
    %474 = vmatpush1.msra.mxu0 0.0
    %475 = vmatprep.subr.mxu0 0.0
    %476 = vmatpush1.msra.mxu0 0.0
    %477 = vmatprep.subr.mxu0 0.0
    %478 = vmatpush1.msra.mxu0 0.0
    %479 = vmatprep.mubr.f32.mxu0 0.0
    %480 = vmatmul.mubr.f32.gmra.mrb[0].mxu0 %v413
    %v481 = vpop.f32.mrb[0].mxu0
    %v482 = vadd.f32 %v411, %v481
    %v483 = vpop.f32.mrb[0].mxu0
    %484 = vdwg.mxu0
    %vm485 = vcmask 31744
    %v487 = vsel %vm485, %v322, 0
    %v490 = vsel %vm485, %v323, 0
    %vm492 = vcmask 1043456
    %v494 = vsel %vm492, %v482, 0
    %496 = vmatprep.subr.mxu0 0.0
    %497 = vmatpush1.msra.mxu0 %v494
    %498 = vmatprep.subr.mxu0 0.0
    %499 = vmatpush1.msra.mxu0 0.0
    %500 = vmatprep.subr.mxu0 0.0
    %501 = vmatpush1.msra.mxu0 0.0
    %502 = vmatprep.subr.mxu0 0.0
    %503 = vmatpush1.msra.mxu0 0.0
    %504 = vmatprep.subr.mxu0 0.0
    %505 = vmatpush1.msra.mxu0 0.0
    %506 = vmatprep.subr.mxu0 0.0
    %507 = vmatpush1.msra.mxu0 0.0
    %508 = vmatprep.subr.mxu0 0.0
    %509 = vmatpush1.msra.mxu0 0.0
    %510 = vmatprep.subr.mxu0 0.0
    %511 = vmatpush1.msra.mxu0 0.0
    %512 = vmatprep.subr.mxu0 0.0
    %513 = vmatpush1.msra.mxu0 0.0
    %514 = vmatprep.subr.mxu0 0.0
    %515 = vmatpush1.msra.mxu0 0.0
    %516 = vmatprep.subr.mxu0 0.0
    %517 = vmatpush1.msra.mxu0 0.0
    %518 = vmatprep.subr.mxu0 0.0
    %519 = vmatpush1.msra.mxu0 0.0
    %520 = vmatprep.subr.mxu0 0.0
    %521 = vmatpush1.msra.mxu0 0.0
    %522 = vmatprep.subr.mxu0 0.0
    %523 = vmatpush1.msra.mxu0 0.0
    %524 = vmatprep.subr.mxu0 0.0
    %525 = vmatpush1.msra.mxu0 0.0
    %526 = vmatprep.subr.mxu0 0.0
    %527 = vmatpush1.msra.mxu0 0.0
    %528 = vmatprep.subr.mxu0 0.0
    %529 = vmatpush1.msra.mxu0 0.0
    %530 = vmatprep.subr.mxu0 0.0
    %531 = vmatpush1.msra.mxu0 0.0
    %532 = vmatprep.subr.mxu0 0.0
    %533 = vmatpush1.msra.mxu0 0.0
    %534 = vmatprep.subr.mxu0 0.0
    %535 = vmatpush1.msra.mxu0 0.0
    %536 = vmatprep.subr.mxu0 0.0
    %537 = vmatpush1.msra.mxu0 0.0
    %538 = vmatprep.subr.mxu0 0.0
    %539 = vmatpush1.msra.mxu0 0.0
    %540 = vmatprep.subr.mxu0 0.0
    %541 = vmatpush1.msra.mxu0 0.0
    %542 = vmatprep.subr.mxu0 0.0
    %543 = vmatpush1.msra.mxu0 0.0
    %544 = vmatprep.subr.mxu0 0.0
    %545 = vmatpush1.msra.mxu0 0.0
    %546 = vmatprep.subr.mxu0 0.0
    %547 = vmatpush1.msra.mxu0 0.0
    %548 = vmatprep.subr.mxu0 0.0
    %549 = vmatpush1.msra.mxu0 0.0
    %550 = vmatprep.subr.mxu0 0.0
    %551 = vmatpush1.msra.mxu0 0.0
    %552 = vmatprep.subr.mxu0 0.0
    %553 = vmatpush1.msra.mxu0 0.0
    %554 = vmatprep.subr.mxu0 0.0
    %555 = vmatpush1.msra.mxu0 0.0
    %556 = vmatprep.subr.mxu0 0.0
    %557 = vmatpush1.msra.mxu0 0.0
    %558 = vmatprep.subr.mxu0 0.0
    %559 = vmatpush1.msra.mxu0 0.0
    %560 = vmatprep.mubr.f32.mxu0 0.0
    %561 = vmatmul.mubr.f32.gmra.mrb[0].mxu0 %v487
    %v562 = vpop.f32.mrb[0].mxu0
    %v563 = vadd.f32 0.0, %v562
    %v564 = vpop.f32.mrb[0].mxu0
    %565 = vmatprep.mubr.f32.mxu0 0.0
    %566 = vmatmul.mubr.f32.gmra.mrb[0].mxu0 %v490
    %v567 = vpop.f32.mrb[0].mxu0
    %v568 = vadd.f32 0.0, %v567
    %v569 = vpop.f32.mrb[0].mxu0
    %570 = vdwg.mxu0
    %v571 = vadd.f32 %v401, %v563
    %v572 = vadd.f32 %v406, %v568
    %vm573 = vcmp.gt.f32.partialorder %v571, 0.0
    %vm574 = vcmp.gt.f32.partialorder %v572, 0.0
    %v575 = vmul.f32 %v571, 0.2
    %v576 = vmul.f32 %v572, 0.2
    %v577 = vsel %vm573, %v571, %v575
    %v578 = vsel %vm574, %v572, %v576
    %v579 = vld [vmem:[#allocation8] sm:$0x1f]
    %vm580 = vcmask 654336
    %v582 = vsel %vm580, %v577, 0
    %v585 = vsel %vm580, %v578, 0
    %v588 = vsel %vm580, %v579, 0
    %590 = vmatprep.subr.mxu0 0.0
    %591 = vmatpush1.xpose.msra.mxu0 %v588
    %592 = vmatprep.subr.mxu0 0.0
    %593 = vmatpush1.xpose.msra.mxu0 0.0
    %594 = vmatprep.subr.mxu0 0.0
    %595 = vmatpush1.xpose.msra.mxu0 0.0
    %596 = vmatprep.subr.mxu0 0.0
    %597 = vmatpush1.xpose.msra.mxu0 0.0
    %598 = vmatprep.subr.mxu0 0.0
    %599 = vmatpush1.xpose.msra.mxu0 0.0
    %600 = vmatprep.subr.mxu0 0.0
    %601 = vmatpush1.xpose.msra.mxu0 0.0
    %602 = vmatprep.subr.mxu0 0.0
    %603 = vmatpush1.xpose.msra.mxu0 0.0
    %604 = vmatprep.subr.mxu0 0.0
    %605 = vmatpush1.xpose.msra.mxu0 0.0
    %606 = vmatprep.subr.mxu0 0.0
    %607 = vmatpush1.xpose.msra.mxu0 0.0
    %608 = vmatprep.subr.mxu0 0.0
    %609 = vmatpush1.xpose.msra.mxu0 0.0
    %610 = vmatprep.subr.mxu0 0.0
    %611 = vmatpush1.xpose.msra.mxu0 0.0
    %612 = vmatprep.subr.mxu0 0.0
    %613 = vmatpush1.xpose.msra.mxu0 0.0
    %614 = vmatprep.subr.mxu0 0.0
    %615 = vmatpush1.xpose.msra.mxu0 0.0
    %616 = vmatprep.subr.mxu0 0.0
    %617 = vmatpush1.xpose.msra.mxu0 0.0
    %618 = vmatprep.subr.mxu0 0.0
    %619 = vmatpush1.xpose.msra.mxu0 0.0
    %620 = vmatprep.subr.mxu0 0.0
    %621 = vmatpush1.xpose.msra.mxu0 0.0
    %622 = vmatprep.subr.mxu0 0.0
    %623 = vmatpush1.xpose.msra.mxu0 0.0
    %624 = vmatprep.subr.mxu0 0.0
    %625 = vmatpush1.xpose.msra.mxu0 0.0
    %626 = vmatprep.subr.mxu0 0.0
    %627 = vmatpush1.xpose.msra.mxu0 0.0
    %628 = vmatprep.subr.mxu0 0.0
    %629 = vmatpush1.xpose.msra.mxu0 0.0
    %630 = vmatprep.subr.mxu0 0.0
    %631 = vmatpush1.xpose.msra.mxu0 0.0
    %632 = vmatprep.subr.mxu0 0.0
    %633 = vmatpush1.xpose.msra.mxu0 0.0
    %634 = vmatprep.subr.mxu0 0.0
    %635 = vmatpush1.xpose.msra.mxu0 0.0
    %636 = vmatprep.subr.mxu0 0.0
    %637 = vmatpush1.xpose.msra.mxu0 0.0
    %638 = vmatprep.subr.mxu0 0.0
    %639 = vmatpush1.xpose.msra.mxu0 0.0
    %640 = vmatprep.subr.mxu0 0.0
    %641 = vmatpush1.xpose.msra.mxu0 0.0
    %642 = vmatprep.subr.mxu0 0.0
    %643 = vmatpush1.xpose.msra.mxu0 0.0
    %644 = vmatprep.subr.mxu0 0.0
    %645 = vmatpush1.xpose.msra.mxu0 0.0
    %646 = vmatprep.subr.mxu0 0.0
    %647 = vmatpush1.xpose.msra.mxu0 0.0
    %648 = vmatprep.subr.mxu0 0.0
    %649 = vmatpush1.xpose.msra.mxu0 0.0
    %650 = vmatprep.subr.mxu0 0.0
    %651 = vmatpush1.xpose.msra.mxu0 0.0
    %652 = vmatprep.subr.mxu0 0.0
    %653 = vmatpush1.xpose.msra.mxu0 0.0
    %654 = vmatprep.mubr.f32.mxu0 0.0
    %655 = vmatmul.mubr.f32.gmra.mrb[0].mxu0 %v582
    %v656 = vpop.f32.mrb[0].mxu0
    %v657 = vadd.f32 0.0, %v656
    %v658 = vpop.f32.mrb[0].mxu0
    %659 = vmatprep.mubr.f32.mxu0 0.0
    %660 = vmatmul.mubr.f32.gmra.mrb[0].mxu0 %v585
    %v661 = vpop.f32.mrb[0].mxu0
    %v662 = vadd.f32 0.0, %v661
    %v663 = vpop.f32.mrb[0].mxu0
    %664 = vdwg.mxu0
    %665 = vmatprep.subr.mxu0 0.0
    %666 = vmatpush1.xpose.msra.mxu0 %v582
    %667 = vmatprep.subr.mxu0 0.0
    %668 = vmatpush1.xpose.msra.mxu0 %v585
    %669 = vmatprep.subr.mxu0 0.0
    %670 = vmatpush1.xpose.msra.mxu0 0.0
    %671 = vmatprep.subr.mxu0 0.0
    %672 = vmatpush1.xpose.msra.mxu0 0.0
    %673 = vmatprep.subr.mxu0 0.0
    %674 = vmatpush1.xpose.msra.mxu0 0.0
    %675 = vmatprep.subr.mxu0 0.0
    %676 = vmatpush1.xpose.msra.mxu0 0.0
    %677 = vmatprep.subr.mxu0 0.0
    %678 = vmatpush1.xpose.msra.mxu0 0.0
    %679 = vmatprep.subr.mxu0 0.0
    %680 = vmatpush1.xpose.msra.mxu0 0.0
    %681 = vmatprep.subr.mxu0 0.0
    %682 = vmatpush1.xpose.msra.mxu0 0.0
    %683 = vmatprep.subr.mxu0 0.0
    %684 = vmatpush1.xpose.msra.mxu0 0.0
    %685 = vmatprep.subr.mxu0 0.0
    %686 = vmatpush1.xpose.msra.mxu0 0.0
    %687 = vmatprep.subr.mxu0 0.0
    %688 = vmatpush1.xpose.msra.mxu0 0.0
    %689 = vmatprep.subr.mxu0 0.0
    %690 = vmatpush1.xpose.msra.mxu0 0.0
    %691 = vmatprep.subr.mxu0 0.0
    %692 = vmatpush1.xpose.msra.mxu0 0.0
    %693 = vmatprep.subr.mxu0 0.0
    %694 = vmatpush1.xpose.msra.mxu0 0.0
    %695 = vmatprep.subr.mxu0 0.0
    %696 = vmatpush1.xpose.msra.mxu0 0.0
    %697 = vmatprep.subr.mxu0 0.0
    %698 = vmatpush1.xpose.msra.mxu0 0.0
    %699 = vmatprep.subr.mxu0 0.0
    %700 = vmatpush1.xpose.msra.mxu0 0.0
    %701 = vmatprep.subr.mxu0 0.0
    %702 = vmatpush1.xpose.msra.mxu0 0.0
    %703 = vmatprep.subr.mxu0 0.0
    %704 = vmatpush1.xpose.msra.mxu0 0.0
    %705 = vmatprep.subr.mxu0 0.0
    %706 = vmatpush1.xpose.msra.mxu0 0.0
    %707 = vmatprep.subr.mxu0 0.0
    %708 = vmatpush1.xpose.msra.mxu0 0.0
    %709 = vmatprep.subr.mxu0 0.0
    %710 = vmatpush1.xpose.msra.mxu0 0.0
    %711 = vmatprep.subr.mxu0 0.0
    %712 = vmatpush1.xpose.msra.mxu0 0.0
    %713 = vmatprep.subr.mxu0 0.0
    %714 = vmatpush1.xpose.msra.mxu0 0.0
    %715 = vmatprep.subr.mxu0 0.0
    %716 = vmatpush1.xpose.msra.mxu0 0.0
    %717 = vmatprep.subr.mxu0 0.0
    %718 = vmatpush1.xpose.msra.mxu0 0.0
    %719 = vmatprep.subr.mxu0 0.0
    %720 = vmatpush1.xpose.msra.mxu0 0.0
    %721 = vmatprep.subr.mxu0 0.0
    %722 = vmatpush1.xpose.msra.mxu0 0.0
    %723 = vmatprep.subr.mxu0 0.0
    %724 = vmatpush1.xpose.msra.mxu0 0.0
    %725 = vmatprep.subr.mxu0 0.0
    %726 = vmatpush1.xpose.msra.mxu0 0.0
    %727 = vmatprep.subr.mxu0 0.0
    %728 = vmatpush1.xpose.msra.mxu0 0.0
    %729 = vmatprep.mubr.f32.mxu0 0.0
    %730 = vmatmul.mubr.f32.gmra.mrb[0].mxu0 %v588
    %v731 = vpop.f32.mrb[0].mxu0
    %v732 = vadd.f32 0.0, %v731
    %v733 = vpop.f32.mrb[0].mxu0
    %734 = vdwg.mxu0
    %v735 = vsub.f32 1.0, %v308
    %v736 = vmul.f32 %v735, -1e+30
    %v737 = vlaneseq
    %v738 = vshrl.u32 %v737, 7
    %v739 = vsub.s32 0, %v738
    %v740 = vrot.slane %v732, %v739
    %v741 = vmul.f32 %v308, %v740
    %v742 = vadd.f32 %v741, %v736
    %vm743 = vcmask 76800
    %v744 = vsel %vm743, %v742, -inf
    %745 = vmax.xlane.f32.xlu0 %v744
    %v746 = vpop.xlane.xlu0 %745
    %v747 = vlaneseq
    %v748 = vshrl.u32 %v747, 7
    %v749 = vsub.s32 1, %v748
    %v750 = vrot.slane %v732, %v749
    %v751 = vmul.f32 %v308, %v750
    %v752 = vadd.f32 %v751, %v736
    %v753 = vsel %vm743, %v752, -inf
    %754 = vmax.xlane.f32.xlu0 %v753
    %v755 = vpop.xlane.xlu0 %754
    %v756 = vlaneseq
    %v757 = vshrl.u32 %v756, 7
    %v758 = vsub.s32 2, %v757
    %v759 = vrot.slane %v732, %v758
    %v760 = vmul.f32 %v308, %v759
    %v761 = vadd.f32 %v760, %v736
    %v762 = vsel %vm743, %v761, -inf
    %763 = vmax.xlane.f32.xlu0 %v762
    %v764 = vpop.xlane.xlu0 %763
    %v765 = vlaneseq
    %v766 = vshrl.u32 %v765, 7
    %v767 = vsub.s32 3, %v766
    %v768 = vrot.slane %v732, %v767
    %v769 = vmul.f32 %v308, %v768
    %v770 = vadd.f32 %v769, %v736
    %v771 = vsel %vm743, %v770, -inf
    %772 = vmax.xlane.f32.xlu0 %v771
    %v773 = vpop.xlane.xlu0 %772
    %v774 = vlaneseq
    %v775 = vshrl.u32 %v774, 7
    %v776 = vsub.s32 4, %v775
    %v777 = vrot.slane %v732, %v776
    %v778 = vmul.f32 %v308, %v777
    %v779 = vadd.f32 %v778, %v736
    %v780 = vsel %vm743, %v779, -inf
    %781 = vmax.xlane.f32.xlu0 %v780
    %v782 = vpop.xlane.xlu0 %781
    %vm783 = vcmask 7168
    %v784 = vsel %vm783, %v746, %v755
    %vm785 = vcmask 15360
    %v786 = vsel %vm785, %v784, %v764
    %vm787 = vcmask 23552
    %v788 = vsel %vm787, %v786, %v773
    %v789 = vsel %vm485, %v788, %v782
    %v791 = vsel %vm492, %v789, 0
    %793 = vmatprep.subr.mxu0 0.0
    %794 = vmatpush1.msra.mxu0 %v791
    %795 = vmatprep.subr.mxu0 0.0
    %796 = vmatpush1.msra.mxu0 0.0
    %797 = vmatprep.subr.mxu0 0.0
    %798 = vmatpush1.msra.mxu0 0.0
    %799 = vmatprep.subr.mxu0 0.0
    %800 = vmatpush1.msra.mxu0 0.0
    %801 = vmatprep.subr.mxu0 0.0
    %802 = vmatpush1.msra.mxu0 0.0
    %803 = vmatprep.subr.mxu0 0.0
    %804 = vmatpush1.msra.mxu0 0.0
    %805 = vmatprep.subr.mxu0 0.0
    %806 = vmatpush1.msra.mxu0 0.0
    %807 = vmatprep.subr.mxu0 0.0
    %808 = vmatpush1.msra.mxu0 0.0
    %809 = vmatprep.subr.mxu0 0.0
    %810 = vmatpush1.msra.mxu0 0.0
    %811 = vmatprep.subr.mxu0 0.0
    %812 = vmatpush1.msra.mxu0 0.0
    %813 = vmatprep.subr.mxu0 0.0
    %814 = vmatpush1.msra.mxu0 0.0
    %815 = vmatprep.subr.mxu0 0.0
    %816 = vmatpush1.msra.mxu0 0.0
    %817 = vmatprep.subr.mxu0 0.0
    %818 = vmatpush1.msra.mxu0 0.0
    %819 = vmatprep.subr.mxu0 0.0
    %820 = vmatpush1.msra.mxu0 0.0
    %821 = vmatprep.subr.mxu0 0.0
    %822 = vmatpush1.msra.mxu0 0.0
    %823 = vmatprep.subr.mxu0 0.0
    %824 = vmatpush1.msra.mxu0 0.0
    %825 = vmatprep.subr.mxu0 0.0
    %826 = vmatpush1.msra.mxu0 0.0
    %827 = vmatprep.subr.mxu0 0.0
    %828 = vmatpush1.msra.mxu0 0.0
    %829 = vmatprep.subr.mxu0 0.0
    %830 = vmatpush1.msra.mxu0 0.0
    %831 = vmatprep.subr.mxu0 0.0
    %832 = vmatpush1.msra.mxu0 0.0
    %833 = vmatprep.subr.mxu0 0.0
    %834 = vmatpush1.msra.mxu0 0.0
    %835 = vmatprep.subr.mxu0 0.0
    %836 = vmatpush1.msra.mxu0 0.0
    %837 = vmatprep.subr.mxu0 0.0
    %838 = vmatpush1.msra.mxu0 0.0
    %839 = vmatprep.subr.mxu0 0.0
    %840 = vmatpush1.msra.mxu0 0.0
    %841 = vmatprep.subr.mxu0 0.0
    %842 = vmatpush1.msra.mxu0 0.0
    %843 = vmatprep.subr.mxu0 0.0
    %844 = vmatpush1.msra.mxu0 0.0
    %845 = vmatprep.subr.mxu0 0.0
    %846 = vmatpush1.msra.mxu0 0.0
    %847 = vmatprep.subr.mxu0 0.0
    %848 = vmatpush1.msra.mxu0 0.0
    %849 = vmatprep.subr.mxu0 0.0
    %850 = vmatpush1.msra.mxu0 0.0
    %851 = vmatprep.subr.mxu0 0.0
    %852 = vmatpush1.msra.mxu0 0.0
    %853 = vmatprep.subr.mxu0 0.0
    %854 = vmatpush1.msra.mxu0 0.0
    %855 = vmatprep.subr.mxu0 0.0
    %856 = vmatpush1.msra.mxu0 0.0
    %857 = vmatprep.mubr.f32.mxu0 0.0
    %858 = vmatmul.mubr.f32.gmra.mrb[0].mxu0 %v487
    %v859 = vpop.f32.mrb[0].mxu0
    %v860 = vadd.f32 0.0, %v859
    %v861 = vpop.f32.mrb[0].mxu0
    %862 = vmatprep.mubr.f32.mxu0 0.0
    %863 = vmatmul.mubr.f32.gmra.mrb[0].mxu0 %v490
    %v864 = vpop.f32.mrb[0].mxu0
    %v865 = vadd.f32 0.0, %v864
    %v866 = vpop.f32.mrb[0].mxu0
    %867 = vdwg.mxu0
    %vm868 = vcmp.ge.s32.totalorder %v119, %v300
    %vm869 = vcmp.ge.s32.totalorder %v120, %v300
    %s870 = sadd.s32 %s297, 4
    %v871 = vstv %s870
    %vm872 = vcmp.lt.s32.totalorder %v119, %v871
    %vm873 = vcmp.lt.s32.totalorder %v120, %v871
    %vm874 = vmand %vm868, %vm872
    %vm875 = vmand %vm869, %vm873
    %v876 = vsub.f32 %v657, %v860
    %v877 = vsub.f32 %v662, %v865
    %v878 = vsel %vm874, 1, 0
    %v879 = vsel %vm875, 1, 0
    %880 = vset.pattern.permute.xlu0 0
    %881 = vperm.xlu0 %880, %v878
    %v882 = vpop.permute.xlu0 %881
    %883 = vset.pattern.permute.xlu0 0
    %884 = vperm.xlu0 %883, %v879
    %v885 = vpop.permute.xlu0 %884
    %vm886 = vcmp.eq.s32.totalorder %v882, 1
    %vm887 = vcmp.eq.s32.totalorder %v885, 1
    %v888 = vsel %vm886, %v876, -1e+30
    %v889 = vsel %vm887, %v877, -1e+30
    %v890 = vmul.f32 %v888, 1.442695
    %v891 = vpow.pop %v890
    %v892 = vmul.f32 %v889, 1.442695
    %v893 = vpow.pop %v892
    %vm894 = vcmask 80896
    %v896 = vsel %vm894, %v308, 0
    %vm898 = vcmask 1041408
    %v900 = vsel %vm898, %v893, 0
    %902 = vmatprep.subr.mxu0 0.0
    %903 = vmatpush1.msra.mxu0 %v891
    %904 = vmatprep.subr.mxu0 0.0
    %905 = vmatpush1.msra.mxu0 %v900
    %906 = vmatprep.subr.mxu0 0.0
    %907 = vmatpush1.msra.mxu0 0.0
    %908 = vmatprep.subr.mxu0 0.0
    %909 = vmatpush1.msra.mxu0 0.0
    %910 = vmatprep.subr.mxu0 0.0
    %911 = vmatpush1.msra.mxu0 0.0
    %912 = vmatprep.subr.mxu0 0.0
    %913 = vmatpush1.msra.mxu0 0.0
    %914 = vmatprep.subr.mxu0 0.0
    %915 = vmatpush1.msra.mxu0 0.0
    %916 = vmatprep.subr.mxu0 0.0
    %917 = vmatpush1.msra.mxu0 0.0
    %918 = vmatprep.subr.mxu0 0.0
    %919 = vmatpush1.msra.mxu0 0.0
    %920 = vmatprep.subr.mxu0 0.0
    %921 = vmatpush1.msra.mxu0 0.0
    %922 = vmatprep.subr.mxu0 0.0
    %923 = vmatpush1.msra.mxu0 0.0
    %924 = vmatprep.subr.mxu0 0.0
    %925 = vmatpush1.msra.mxu0 0.0
    %926 = vmatprep.subr.mxu0 0.0
    %927 = vmatpush1.msra.mxu0 0.0
    %928 = vmatprep.subr.mxu0 0.0
    %929 = vmatpush1.msra.mxu0 0.0
    %930 = vmatprep.subr.mxu0 0.0
    %931 = vmatpush1.msra.mxu0 0.0
    %932 = vmatprep.subr.mxu0 0.0
    %933 = vmatpush1.msra.mxu0 0.0
    %934 = vmatprep.subr.mxu0 0.0
    %935 = vmatpush1.msra.mxu0 0.0
    %936 = vmatprep.subr.mxu0 0.0
    %937 = vmatpush1.msra.mxu0 0.0
    %938 = vmatprep.subr.mxu0 0.0
    %939 = vmatpush1.msra.mxu0 0.0
    %940 = vmatprep.subr.mxu0 0.0
    %941 = vmatpush1.msra.mxu0 0.0
    %942 = vmatprep.subr.mxu0 0.0
    %943 = vmatpush1.msra.mxu0 0.0
    %944 = vmatprep.subr.mxu0 0.0
    %945 = vmatpush1.msra.mxu0 0.0
    %946 = vmatprep.subr.mxu0 0.0
    %947 = vmatpush1.msra.mxu0 0.0
    %948 = vmatprep.subr.mxu0 0.0
    %949 = vmatpush1.msra.mxu0 0.0
    %950 = vmatprep.subr.mxu0 0.0
    %951 = vmatpush1.msra.mxu0 0.0
    %952 = vmatprep.subr.mxu0 0.0
    %953 = vmatpush1.msra.mxu0 0.0
    %954 = vmatprep.subr.mxu0 0.0
    %955 = vmatpush1.msra.mxu0 0.0
    %956 = vmatprep.subr.mxu0 0.0
    %957 = vmatpush1.msra.mxu0 0.0
    %958 = vmatprep.subr.mxu0 0.0
    %959 = vmatpush1.msra.mxu0 0.0
    %960 = vmatprep.subr.mxu0 0.0
    %961 = vmatpush1.msra.mxu0 0.0
    %962 = vmatprep.subr.mxu0 0.0
    %963 = vmatpush1.msra.mxu0 0.0
    %964 = vmatprep.subr.mxu0 0.0
    %965 = vmatpush1.msra.mxu0 0.0
    %966 = vmatprep.mubr.f32.mxu0 0.0
    %967 = vmatmul.mubr.f32.gmra.mrb[0].mxu0 %v896
    %v968 = vpop.f32.mrb[0].mxu0
    %v969 = vadd.f32 0.0, %v968
    %v970 = vpop.f32.mrb[0].mxu0
    %971 = vdwg.mxu0
    %v973 = vsel %vm492, %v969, 0
    %975 = vmatprep.subr.mxu0 0.0
    %976 = vmatpush1.msra.mxu0 %v973
    %977 = vmatprep.subr.mxu0 0.0
    %978 = vmatpush1.msra.mxu0 0.0
    %979 = vmatprep.subr.mxu0 0.0
    %980 = vmatpush1.msra.mxu0 0.0
    %981 = vmatprep.subr.mxu0 0.0
    %982 = vmatpush1.msra.mxu0 0.0
    %983 = vmatprep.subr.mxu0 0.0
    %984 = vmatpush1.msra.mxu0 0.0
    %985 = vmatprep.subr.mxu0 0.0
    %986 = vmatpush1.msra.mxu0 0.0
    %987 = vmatprep.subr.mxu0 0.0
    %988 = vmatpush1.msra.mxu0 0.0
    %989 = vmatprep.subr.mxu0 0.0
    %990 = vmatpush1.msra.mxu0 0.0
    %991 = vmatprep.subr.mxu0 0.0
    %992 = vmatpush1.msra.mxu0 0.0
    %993 = vmatprep.subr.mxu0 0.0
    %994 = vmatpush1.msra.mxu0 0.0
    %995 = vmatprep.subr.mxu0 0.0
    %996 = vmatpush1.msra.mxu0 0.0
    %997 = vmatprep.subr.mxu0 0.0
    %998 = vmatpush1.msra.mxu0 0.0
    %999 = vmatprep.subr.mxu0 0.0
    %1000 = vmatpush1.msra.mxu0 0.0
    %1001 = vmatprep.subr.mxu0 0.0
    %1002 = vmatpush1.msra.mxu0 0.0
    %1003 = vmatprep.subr.mxu0 0.0
    %1004 = vmatpush1.msra.mxu0 0.0
    %1005 = vmatprep.subr.mxu0 0.0
    %1006 = vmatpush1.msra.mxu0 0.0
    %1007 = vmatprep.subr.mxu0 0.0
    %1008 = vmatpush1.msra.mxu0 0.0
    %1009 = vmatprep.subr.mxu0 0.0
    %1010 = vmatpush1.msra.mxu0 0.0
    %1011 = vmatprep.subr.mxu0 0.0
    %1012 = vmatpush1.msra.mxu0 0.0
    %1013 = vmatprep.subr.mxu0 0.0
    %1014 = vmatpush1.msra.mxu0 0.0
    %1015 = vmatprep.subr.mxu0 0.0
    %1016 = vmatpush1.msra.mxu0 0.0
    %1017 = vmatprep.subr.mxu0 0.0
    %1018 = vmatpush1.msra.mxu0 0.0
    %1019 = vmatprep.subr.mxu0 0.0
    %1020 = vmatpush1.msra.mxu0 0.0
    %1021 = vmatprep.subr.mxu0 0.0
    %1022 = vmatpush1.msra.mxu0 0.0
    %1023 = vmatprep.subr.mxu0 0.0
    %1024 = vmatpush1.msra.mxu0 0.0
    %1025 = vmatprep.subr.mxu0 0.0
    %1026 = vmatpush1.msra.mxu0 0.0
    %1027 = vmatprep.subr.mxu0 0.0
    %1028 = vmatpush1.msra.mxu0 0.0
    %1029 = vmatprep.subr.mxu0 0.0
    %1030 = vmatpush1.msra.mxu0 0.0
    %1031 = vmatprep.subr.mxu0 0.0
    %1032 = vmatpush1.msra.mxu0 0.0
    %1033 = vmatprep.subr.mxu0 0.0
    %1034 = vmatpush1.msra.mxu0 0.0
    %1035 = vmatprep.subr.mxu0 0.0
    %1036 = vmatpush1.msra.mxu0 0.0
    %1037 = vmatprep.subr.mxu0 0.0
    %1038 = vmatpush1.msra.mxu0 0.0
    %1039 = vmatprep.mubr.f32.mxu0 0.0
    %1040 = vmatmul.mubr.f32.gmra.mrb[0].mxu0 %v487
    %v1041 = vpop.f32.mrb[0].mxu0
    %v1042 = vadd.f32 1e-20, %v1041
    %v1043 = vpop.f32.mrb[0].mxu0
    %1044 = vmatprep.mubr.f32.mxu0 0.0
    %1045 = vmatmul.mubr.f32.gmra.mrb[0].mxu0 %v490
    %v1046 = vpop.f32.mrb[0].mxu0
    %v1047 = vadd.f32 1e-20, %v1046
    %v1048 = vpop.f32.mrb[0].mxu0
    %1049 = vdwg.mxu0
    %v1050 = vrcp.pop %v1042
    %v1051 = vmul.f32 %v891, %v1050
    %v1052 = vrcp.pop %v1047
    %v1053 = vmul.f32 %v893, %v1052
    %v1054 = vmul.u32 %v299, 16
    %vm1055 = vcmp.ge.s32.totalorder %v310, %v1054
    %v1056 = vadd.s32 %v299, 1
    %v1057 = vmul.u32 %v1056, 16
    %vm1058 = vcmp.lt.s32.totalorder %v310, %v1057
    %vm1059 = vmand %vm1055, %vm1058
    %v1060 = vsel %vm1059, 1, 0
    %v1061 = vcvt.s32.f32 %v1060
    %vm1062 = vcmask 39936
    %v1064 = vsel %vm1062, %v1051, 0
    %v1067 = vsel %vm1062, %v1053, 0
    %vm1069 = vcmask 1044480
    %v1071 = vsel %vm1069, %v1061, 0
    %1073 = vmatprep.subr.mxu0 0.0
    %1074 = vmatpush1.msra.mxu0 %v1071
    %1075 = vmatprep.subr.mxu0 0.0
    %1076 = vmatpush1.msra.mxu0 0.0
    %1077 = vmatprep.subr.mxu0 0.0
    %1078 = vmatpush1.msra.mxu0 0.0
    %1079 = vmatprep.subr.mxu0 0.0
    %1080 = vmatpush1.msra.mxu0 0.0
    %1081 = vmatprep.subr.mxu0 0.0
    %1082 = vmatpush1.msra.mxu0 0.0
    %1083 = vmatprep.subr.mxu0 0.0
    %1084 = vmatpush1.msra.mxu0 0.0
    %1085 = vmatprep.subr.mxu0 0.0
    %1086 = vmatpush1.msra.mxu0 0.0
    %1087 = vmatprep.subr.mxu0 0.0
    %1088 = vmatpush1.msra.mxu0 0.0
    %1089 = vmatprep.subr.mxu0 0.0
    %1090 = vmatpush1.msra.mxu0 0.0
    %1091 = vmatprep.subr.mxu0 0.0
    %1092 = vmatpush1.msra.mxu0 0.0
    %1093 = vmatprep.subr.mxu0 0.0
    %1094 = vmatpush1.msra.mxu0 0.0
    %1095 = vmatprep.subr.mxu0 0.0
    %1096 = vmatpush1.msra.mxu0 0.0
    %1097 = vmatprep.subr.mxu0 0.0
    %1098 = vmatpush1.msra.mxu0 0.0
    %1099 = vmatprep.subr.mxu0 0.0
    %1100 = vmatpush1.msra.mxu0 0.0
    %1101 = vmatprep.subr.mxu0 0.0
    %1102 = vmatpush1.msra.mxu0 0.0
    %1103 = vmatprep.subr.mxu0 0.0
    %1104 = vmatpush1.msra.mxu0 0.0
    %1105 = vmatprep.subr.mxu0 0.0
    %1106 = vmatpush1.msra.mxu0 0.0
    %1107 = vmatprep.subr.mxu0 0.0
    %1108 = vmatpush1.msra.mxu0 0.0
    %1109 = vmatprep.subr.mxu0 0.0
    %1110 = vmatpush1.msra.mxu0 0.0
    %1111 = vmatprep.subr.mxu0 0.0
    %1112 = vmatpush1.msra.mxu0 0.0
    %1113 = vmatprep.subr.mxu0 0.0
    %1114 = vmatpush1.msra.mxu0 0.0
    %1115 = vmatprep.subr.mxu0 0.0
    %1116 = vmatpush1.msra.mxu0 0.0
    %1117 = vmatprep.subr.mxu0 0.0
    %1118 = vmatpush1.msra.mxu0 0.0
    %1119 = vmatprep.subr.mxu0 0.0
    %1120 = vmatpush1.msra.mxu0 0.0
    %1121 = vmatprep.subr.mxu0 0.0
    %1122 = vmatpush1.msra.mxu0 0.0
    %1123 = vmatprep.subr.mxu0 0.0
    %1124 = vmatpush1.msra.mxu0 0.0
    %1125 = vmatprep.subr.mxu0 0.0
    %1126 = vmatpush1.msra.mxu0 0.0
    %1127 = vmatprep.subr.mxu0 0.0
    %1128 = vmatpush1.msra.mxu0 0.0
    %1129 = vmatprep.subr.mxu0 0.0
    %1130 = vmatpush1.msra.mxu0 0.0
    %1131 = vmatprep.subr.mxu0 0.0
    %1132 = vmatpush1.msra.mxu0 0.0
    %1133 = vmatprep.subr.mxu0 0.0
    %1134 = vmatpush1.msra.mxu0 0.0
    %1135 = vmatprep.subr.mxu0 0.0
    %1136 = vmatpush1.msra.mxu0 0.0
    %1137 = vmatprep.mubr.f32.mxu0 0.0
    %1138 = vmatmul.mubr.f32.gmra.mrb[0].mxu0 %v1064
    %v1139 = vpop.f32.mrb[0].mxu0
    %v1140 = vadd.f32 0.0, %v1139
    %v1141 = vpop.f32.mrb[0].mxu0
    %1142 = vmatprep.mubr.f32.mxu0 0.0
    %1143 = vmatmul.mubr.f32.gmra.mrb[0].mxu0 %v1067
    %v1144 = vpop.f32.mrb[0].mxu0
    %v1145 = vadd.f32 0.0, %v1144
    %v1146 = vpop.f32.mrb[0].mxu0
    %1147 = vdwg.mxu0
    %v1148 = vmul.f32 %v1140, %v401
    %v1149 = vmul.f32 %v1145, %v406
    %v1150 = vld [vmem:[#allocation11 + $0x4] ss:$0 sm:$0xff]
    %v1152 = vsel %vm898, %v1149, 0
    %1154 = vmatprep.subr.mxu0 0.0
    %1155 = vmatpush1.msra.mxu0 %v1148
    %1156 = vmatprep.subr.mxu0 0.0
    %1157 = vmatpush1.msra.mxu0 %v1152
    %1158 = vmatprep.subr.mxu0 0.0
    %1159 = vmatpush1.msra.mxu0 0.0
    %1160 = vmatprep.subr.mxu0 0.0
    %1161 = vmatpush1.msra.mxu0 0.0
    %1162 = vmatprep.subr.mxu0 0.0
    %1163 = vmatpush1.msra.mxu0 0.0
    %1164 = vmatprep.subr.mxu0 0.0
    %1165 = vmatpush1.msra.mxu0 0.0
    %1166 = vmatprep.subr.mxu0 0.0
    %1167 = vmatpush1.msra.mxu0 0.0
    %1168 = vmatprep.subr.mxu0 0.0
    %1169 = vmatpush1.msra.mxu0 0.0
    %1170 = vmatprep.subr.mxu0 0.0
    %1171 = vmatpush1.msra.mxu0 0.0
    %1172 = vmatprep.subr.mxu0 0.0
    %1173 = vmatpush1.msra.mxu0 0.0
    %1174 = vmatprep.subr.mxu0 0.0
    %1175 = vmatpush1.msra.mxu0 0.0
    %1176 = vmatprep.subr.mxu0 0.0
    %1177 = vmatpush1.msra.mxu0 0.0
    %1178 = vmatprep.subr.mxu0 0.0
    %1179 = vmatpush1.msra.mxu0 0.0
    %1180 = vmatprep.subr.mxu0 0.0
    %1181 = vmatpush1.msra.mxu0 0.0
    %1182 = vmatprep.subr.mxu0 0.0
    %1183 = vmatpush1.msra.mxu0 0.0
    %1184 = vmatprep.subr.mxu0 0.0
    %1185 = vmatpush1.msra.mxu0 0.0
    %1186 = vmatprep.subr.mxu0 0.0
    %1187 = vmatpush1.msra.mxu0 0.0
    %1188 = vmatprep.subr.mxu0 0.0
    %1189 = vmatpush1.msra.mxu0 0.0
    %1190 = vmatprep.subr.mxu0 0.0
    %1191 = vmatpush1.msra.mxu0 0.0
    %1192 = vmatprep.subr.mxu0 0.0
    %1193 = vmatpush1.msra.mxu0 0.0
    %1194 = vmatprep.subr.mxu0 0.0
    %1195 = vmatpush1.msra.mxu0 0.0
    %1196 = vmatprep.subr.mxu0 0.0
    %1197 = vmatpush1.msra.mxu0 0.0
    %1198 = vmatprep.subr.mxu0 0.0
    %1199 = vmatpush1.msra.mxu0 0.0
    %1200 = vmatprep.subr.mxu0 0.0
    %1201 = vmatpush1.msra.mxu0 0.0
    %1202 = vmatprep.subr.mxu0 0.0
    %1203 = vmatpush1.msra.mxu0 0.0
    %1204 = vmatprep.subr.mxu0 0.0
    %1205 = vmatpush1.msra.mxu0 0.0
    %1206 = vmatprep.subr.mxu0 0.0
    %1207 = vmatpush1.msra.mxu0 0.0
    %1208 = vmatprep.subr.mxu0 0.0
    %1209 = vmatpush1.msra.mxu0 0.0
    %1210 = vmatprep.subr.mxu0 0.0
    %1211 = vmatpush1.msra.mxu0 0.0
    %1212 = vmatprep.subr.mxu0 0.0
    %1213 = vmatpush1.msra.mxu0 0.0
    %1214 = vmatprep.subr.mxu0 0.0
    %1215 = vmatpush1.msra.mxu0 0.0
    %1216 = vmatprep.subr.mxu0 0.0
    %1217 = vmatpush1.msra.mxu0 0.0
    %1218 = vmatprep.mubr.f32.mxu0 0.0
    %1219 = vmatmul.mubr.f32.gmra.mrb[0].mxu0 %v896
    %v1220 = vpop.f32.mrb[0].mxu0
    %v1221 = vadd.f32 %v1150, %v1220
    %v1222 = vpop.f32.mrb[0].mxu0
    %1223 = vdwg.mxu0
    %v1224 = vmax.f32 %v1221, 0.0
    %v1225 = vld [vmem:[%s7] sm:$0xff]
    %v1226 = vld [vmem:[%s7 + $0x8] sm:$0xff]
    %v1227 = vld [vmem:[%s7 + $0x10] sm:$0xff]
    %v1228 = vld [vmem:[%s7 + $0x18] sm:$0xff]
    %v1229 = vld [vmem:[%s7 + $0x20] sm:$0xff]
    %v1230 = vld [vmem:[%s7 + $0x28] sm:$0xff]
    %v1231 = vld [vmem:[%s7 + $0x30] sm:$0xff]
    %v1232 = vld [vmem:[%s7 + $0x38] sm:$0xff]
    %v1233 = vld [vmem:[%s7 + $0x40] sm:$0xff]
    %v1234 = vld [vmem:[%s7 + $0x48] sm:$0xff]
    %v1235 = vld [vmem:[%s7 + $0x50] sm:$0xff]
    %v1236 = vld [vmem:[%s7 + $0x58] sm:$0xff]
    %v1237 = vld [vmem:[%s7 + $0x60] sm:$0xff]
    %v1238 = vld [vmem:[%s7 + $0x68] sm:$0xff]
    %v1239 = vld [vmem:[%s7 + $0x70] sm:$0xff]
    %v1240 = vld [vmem:[%s7 + $0x78] sm:$0xff]
    %v1241 = vld [vmem:[%s7 + $0x80] sm:$0xff]
    %v1242 = vld [vmem:[%s7 + $0x88] sm:$0xff]
    %v1243 = vld [vmem:[%s7 + $0x90] sm:$0xff]
    %v1244 = vld [vmem:[%s7 + $0x98] sm:$0xff]
    %v1245 = vld [vmem:[%s7 + $0xa0] sm:$0xff]
    %v1246 = vld [vmem:[%s7 + $0xa8] sm:$0xff]
    %v1247 = vld [vmem:[%s7 + $0xb0] sm:$0xff]
    %v1248 = vld [vmem:[%s7 + $0xb8] sm:$0xff]
    %v1249 = vld [vmem:[%s7 + $0xc0] sm:$0xff]
    %v1250 = vld [vmem:[%s7 + $0xc8] sm:$0xff]
    %v1251 = vld [vmem:[%s7 + $0xd0] sm:$0xff]
    %v1252 = vld [vmem:[%s7 + $0xd8] sm:$0xff]
    %v1253 = vld [vmem:[%s7 + $0xe0] sm:$0xff]
    %v1254 = vld [vmem:[%s7 + $0xe8] sm:$0xff]
    %v1255 = vld [vmem:[%s7 + $0xf0] sm:$0xff]
    %v1256 = vld [vmem:[%s7 + $0xf8] sm:$0xff]
    %v1257 = vld [vmem:[%s7 + $0x100] sm:$0xff]
    %v1258 = vld [vmem:[%s7 + $0x108] sm:$0xff]
    %v1259 = vld [vmem:[%s7 + $0x110] sm:$0xff]
    %v1260 = vld [vmem:[%s7 + $0x118] sm:$0xff]
    %v1261 = vld [vmem:[%s7 + $0x120] sm:$0xff]
    %v1262 = vld [vmem:[%s7 + $0x128] sm:$0xff]
    %v1263 = vld [vmem:[%s7 + $0x130] sm:$0xff]
    %v1264 = vld [vmem:[%s7 + $0x138] sm:$0xff]
    %v1265 = vld [vmem:[%s7 + $0x140] sm:$0xff]
    %v1266 = vld [vmem:[%s7 + $0x148] sm:$0xff]
    %v1267 = vld [vmem:[%s7 + $0x150] sm:$0xff]
    %v1268 = vld [vmem:[%s7 + $0x158] sm:$0xff]
    %v1269 = vld [vmem:[%s7 + $0x160] sm:$0xff]
    %v1270 = vld [vmem:[%s7 + $0x168] sm:$0xff]
    %v1271 = vld [vmem:[%s7 + $0x170] sm:$0xff]
    %v1272 = vld [vmem:[%s7 + $0x178] sm:$0xff]
    %v1274 = vsel %vm580, %v1224, 0
    %1276 = vmatprep.subr.mxu0 %v1234
    %1277 = vmatpush1.msra.mxu0 %v1233
    %1278 = vmatprep.subr.mxu0 %v1238
    %1279 = vmatpush1.msra.mxu0 %v1237
    %1280 = vmatprep.subr.mxu0 %v1242
    %1281 = vmatpush1.msra.mxu0 %v1241
    %1282 = vmatprep.subr.mxu0 %v1246
    %1283 = vmatpush1.msra.mxu0 %v1245
    %1284 = vmatprep.subr.mxu0 %v1250
    %1285 = vmatpush1.msra.mxu0 %v1249
    %1286 = vmatprep.subr.mxu0 %v1254
    %1287 = vmatpush1.msra.mxu0 %v1253
    %1288 = vmatprep.subr.mxu0 %v1258
    %1289 = vmatpush1.msra.mxu0 %v1257
    %1290 = vmatprep.subr.mxu0 %v1262
    %1291 = vmatpush1.msra.mxu0 %v1261
    %1292 = vmatprep.subr.mxu0 %v1266
    %1293 = vmatpush1.msra.mxu0 %v1265
    %1294 = vmatprep.subr.mxu0 %v1270
    %1295 = vmatpush1.msra.mxu0 %v1269
    %1296 = vmatprep.subr.mxu0 0.0
    %1297 = vmatpush1.msra.mxu0 0.0
    %1298 = vmatprep.subr.mxu0 0.0
    %1299 = vmatpush1.msra.mxu0 0.0
    %1300 = vmatprep.subr.mxu0 0.0
    %1301 = vmatpush1.msra.mxu0 0.0
    %1302 = vmatprep.subr.mxu0 0.0
    %1303 = vmatpush1.msra.mxu0 0.0
    %1304 = vmatprep.subr.mxu0 0.0
    %1305 = vmatpush1.msra.mxu0 0.0
    %1306 = vmatprep.subr.mxu0 0.0
    %1307 = vmatpush1.msra.mxu0 0.0
    %1308 = vmatprep.subr.mxu0 0.0
    %1309 = vmatpush1.msra.mxu0 0.0
    %1310 = vmatprep.subr.mxu0 0.0
    %1311 = vmatpush1.msra.mxu0 0.0
    %1312 = vmatprep.subr.mxu0 0.0
    %1313 = vmatpush1.msra.mxu0 0.0
    %1314 = vmatprep.subr.mxu0 0.0
    %1315 = vmatpush1.msra.mxu0 0.0
    %1316 = vmatprep.subr.mxu0 0.0
    %1317 = vmatpush1.msra.mxu0 0.0
    %1318 = vmatprep.subr.mxu0 0.0
    %1319 = vmatpush1.msra.mxu0 0.0
    %1320 = vmatprep.subr.mxu0 0.0
    %1321 = vmatpush1.msra.mxu0 0.0
    %1322 = vmatprep.subr.mxu0 0.0
    %1323 = vmatpush1.msra.mxu0 0.0
    %1324 = vmatprep.subr.mxu0 0.0
    %1325 = vmatpush1.msra.mxu0 0.0
    %1326 = vmatprep.subr.mxu0 0.0
    %1327 = vmatpush1.msra.mxu0 0.0
    %1328 = vmatprep.subr.mxu0 0.0
    %1329 = vmatpush1.msra.mxu0 0.0
    %1330 = vmatprep.subr.mxu0 0.0
    %1331 = vmatpush1.msra.mxu0 0.0
    %1332 = vmatprep.subr.mxu0 0.0
    %1333 = vmatpush1.msra.mxu0 0.0
    %1334 = vmatprep.subr.mxu0 0.0
    %1335 = vmatpush1.msra.mxu0 0.0
    %1336 = vmatprep.subr.mxu0 0.0
    %1337 = vmatpush1.msra.mxu0 0.0
    %1338 = vmatprep.subr.mxu0 0.0
    %1339 = vmatpush1.msra.mxu0 0.0
    %1340 = vmatprep.mubr.f32.mxu0 0.0
    %1341 = vmatmul.mubr.f32.gmra.mrb[0].mxu0 %v1274
    %v1342 = vpop.f32.mrb[0].mxu0
    %v1343 = vadd.f32 0.0, %v1342
    %v1344 = vpop.f32.mrb[0].mxu0
    %v1345 = vadd.f32 0.0, %v1344
    %1346 = vdwg.mxu0
    %1347 = vmatprep.subr.mxu0 %v1236
    %1348 = vmatpush1.msra.mxu0 %v1235
    %1349 = vmatprep.subr.mxu0 %v1240
    %1350 = vmatpush1.msra.mxu0 %v1239
    %1351 = vmatprep.subr.mxu0 %v1244
    %1352 = vmatpush1.msra.mxu0 %v1243
    %1353 = vmatprep.subr.mxu0 %v1248
    %1354 = vmatpush1.msra.mxu0 %v1247
    %1355 = vmatprep.subr.mxu0 %v1252
    %1356 = vmatpush1.msra.mxu0 %v1251
    %1357 = vmatprep.subr.mxu0 %v1256
    %1358 = vmatpush1.msra.mxu0 %v1255
    %1359 = vmatprep.subr.mxu0 %v1260
    %1360 = vmatpush1.msra.mxu0 %v1259
    %1361 = vmatprep.subr.mxu0 %v1264
    %1362 = vmatpush1.msra.mxu0 %v1263
    %1363 = vmatprep.subr.mxu0 %v1268
    %1364 = vmatpush1.msra.mxu0 %v1267
    %1365 = vmatprep.subr.mxu0 %v1272
    %1366 = vmatpush1.msra.mxu0 %v1271
    %1367 = vmatprep.subr.mxu0 0.0
    %1368 = vmatpush1.msra.mxu0 0.0
    %1369 = vmatprep.subr.mxu0 0.0
    %1370 = vmatpush1.msra.mxu0 0.0
    %1371 = vmatprep.subr.mxu0 0.0
    %1372 = vmatpush1.msra.mxu0 0.0
    %1373 = vmatprep.subr.mxu0 0.0
    %1374 = vmatpush1.msra.mxu0 0.0
    %1375 = vmatprep.subr.mxu0 0.0
    %1376 = vmatpush1.msra.mxu0 0.0
    %1377 = vmatprep.subr.mxu0 0.0
    %1378 = vmatpush1.msra.mxu0 0.0
    %1379 = vmatprep.subr.mxu0 0.0
    %1380 = vmatpush1.msra.mxu0 0.0
    %1381 = vmatprep.subr.mxu0 0.0
    %1382 = vmatpush1.msra.mxu0 0.0
    %1383 = vmatprep.subr.mxu0 0.0
    %1384 = vmatpush1.msra.mxu0 0.0
    %1385 = vmatprep.subr.mxu0 0.0
    %1386 = vmatpush1.msra.mxu0 0.0
    %1387 = vmatprep.subr.mxu0 0.0
    %1388 = vmatpush1.msra.mxu0 0.0
    %1389 = vmatprep.subr.mxu0 0.0
    %1390 = vmatpush1.msra.mxu0 0.0
    %1391 = vmatprep.subr.mxu0 0.0
    %1392 = vmatpush1.msra.mxu0 0.0
    %1393 = vmatprep.subr.mxu0 0.0
    %1394 = vmatpush1.msra.mxu0 0.0
    %1395 = vmatprep.subr.mxu0 0.0
    %1396 = vmatpush1.msra.mxu0 0.0
    %1397 = vmatprep.subr.mxu0 0.0
    %1398 = vmatpush1.msra.mxu0 0.0
    %1399 = vmatprep.subr.mxu0 0.0
    %1400 = vmatpush1.msra.mxu0 0.0
    %1401 = vmatprep.subr.mxu0 0.0
    %1402 = vmatpush1.msra.mxu0 0.0
    %1403 = vmatprep.subr.mxu0 0.0
    %1404 = vmatpush1.msra.mxu0 0.0
    %1405 = vmatprep.subr.mxu0 0.0
    %1406 = vmatpush1.msra.mxu0 0.0
    %1407 = vmatprep.subr.mxu0 0.0
    %1408 = vmatpush1.msra.mxu0 0.0
    %1409 = vmatprep.subr.mxu0 0.0
    %1410 = vmatpush1.msra.mxu0 0.0
    %1411 = vmatprep.mubr.f32.mxu0 0.0
    %1412 = vmatmul.mubr.f32.gmra.mrb[0].mxu0 %v1274
    %v1413 = vpop.f32.mrb[0].mxu0
    %v1414 = vadd.f32 0.0, %v1413
    %v1415 = vpop.f32.mrb[0].mxu0
    %v1416 = vadd.f32 0.0, %v1415
    %1417 = vdwg.mxu0
    %1418 = vmatprep.subr.mxu0 %v1226
    %1419 = vmatpush1.msra.mxu0 %v1225
    %1420 = vmatprep.subr.mxu0 %v1230
    %1421 = vmatpush1.msra.mxu0 %v1229
    %1422 = vmatprep.subr.mxu0 0.0
    %1423 = vmatpush1.msra.mxu0 0.0
    %1424 = vmatprep.subr.mxu0 0.0
    %1425 = vmatpush1.msra.mxu0 0.0
    %1426 = vmatprep.subr.mxu0 0.0
    %1427 = vmatpush1.msra.mxu0 0.0
    %1428 = vmatprep.subr.mxu0 0.0
    %1429 = vmatpush1.msra.mxu0 0.0
    %1430 = vmatprep.subr.mxu0 0.0
    %1431 = vmatpush1.msra.mxu0 0.0
    %1432 = vmatprep.subr.mxu0 0.0
    %1433 = vmatpush1.msra.mxu0 0.0
    %1434 = vmatprep.subr.mxu0 0.0
    %1435 = vmatpush1.msra.mxu0 0.0
    %1436 = vmatprep.subr.mxu0 0.0
    %1437 = vmatpush1.msra.mxu0 0.0
    %1438 = vmatprep.subr.mxu0 0.0
    %1439 = vmatpush1.msra.mxu0 0.0
    %1440 = vmatprep.subr.mxu0 0.0
    %1441 = vmatpush1.msra.mxu0 0.0
    %1442 = vmatprep.subr.mxu0 0.0
    %1443 = vmatpush1.msra.mxu0 0.0
    %1444 = vmatprep.subr.mxu0 0.0
    %1445 = vmatpush1.msra.mxu0 0.0
    %1446 = vmatprep.subr.mxu0 0.0
    %1447 = vmatpush1.msra.mxu0 0.0
    %1448 = vmatprep.subr.mxu0 0.0
    %1449 = vmatpush1.msra.mxu0 0.0
    %1450 = vmatprep.subr.mxu0 0.0
    %1451 = vmatpush1.msra.mxu0 0.0
    %1452 = vmatprep.subr.mxu0 0.0
    %1453 = vmatpush1.msra.mxu0 0.0
    %1454 = vmatprep.subr.mxu0 0.0
    %1455 = vmatpush1.msra.mxu0 0.0
    %1456 = vmatprep.subr.mxu0 0.0
    %1457 = vmatpush1.msra.mxu0 0.0
    %1458 = vmatprep.subr.mxu0 0.0
    %1459 = vmatpush1.msra.mxu0 0.0
    %1460 = vmatprep.subr.mxu0 0.0
    %1461 = vmatpush1.msra.mxu0 0.0
    %1462 = vmatprep.subr.mxu0 0.0
    %1463 = vmatpush1.msra.mxu0 0.0
    %1464 = vmatprep.subr.mxu0 0.0
    %1465 = vmatpush1.msra.mxu0 0.0
    %1466 = vmatprep.subr.mxu0 0.0
    %1467 = vmatpush1.msra.mxu0 0.0
    %1468 = vmatprep.subr.mxu0 0.0
    %1469 = vmatpush1.msra.mxu0 0.0
    %1470 = vmatprep.subr.mxu0 0.0
    %1471 = vmatpush1.msra.mxu0 0.0
    %1472 = vmatprep.subr.mxu0 0.0
    %1473 = vmatpush1.msra.mxu0 0.0
    %1474 = vmatprep.subr.mxu0 0.0
    %1475 = vmatpush1.msra.mxu0 0.0
    %1476 = vmatprep.subr.mxu0 0.0
    %1477 = vmatpush1.msra.mxu0 0.0
    %1478 = vmatprep.subr.mxu0 0.0
    %1479 = vmatpush1.msra.mxu0 0.0
    %1480 = vmatprep.subr.mxu0 0.0
    %1481 = vmatpush1.msra.mxu0 0.0
    %1482 = vmatprep.mubr.f32.mxu0 0.0
    %1483 = vmatmul.mubr.f32.gmra.mrb[0].mxu0 %v413
    %v1484 = vpop.f32.mrb[0].mxu0
    %v1485 = vadd.f32 %v1343, %v1484
    %v1486 = vpop.f32.mrb[0].mxu0
    %v1487 = vadd.f32 %v1345, %v1486
    %1488 = vdwg.mxu0
    %1489 = vmatprep.subr.mxu0 %v1228
    %1490 = vmatpush1.msra.mxu0 %v1227
    %1491 = vmatprep.subr.mxu0 %v1232
    %1492 = vmatpush1.msra.mxu0 %v1231
    %1493 = vmatprep.subr.mxu0 0.0
    %1494 = vmatpush1.msra.mxu0 0.0
    %1495 = vmatprep.subr.mxu0 0.0
    %1496 = vmatpush1.msra.mxu0 0.0
    %1497 = vmatprep.subr.mxu0 0.0
    %1498 = vmatpush1.msra.mxu0 0.0
    %1499 = vmatprep.subr.mxu0 0.0
    %1500 = vmatpush1.msra.mxu0 0.0
    %1501 = vmatprep.subr.mxu0 0.0
    %1502 = vmatpush1.msra.mxu0 0.0
    %1503 = vmatprep.subr.mxu0 0.0
    %1504 = vmatpush1.msra.mxu0 0.0
    %1505 = vmatprep.subr.mxu0 0.0
    %1506 = vmatpush1.msra.mxu0 0.0
    %1507 = vmatprep.subr.mxu0 0.0
    %1508 = vmatpush1.msra.mxu0 0.0
    %1509 = vmatprep.subr.mxu0 0.0
    %1510 = vmatpush1.msra.mxu0 0.0
    %1511 = vmatprep.subr.mxu0 0.0
    %1512 = vmatpush1.msra.mxu0 0.0
    %1513 = vmatprep.subr.mxu0 0.0
    %1514 = vmatpush1.msra.mxu0 0.0
    %1515 = vmatprep.subr.mxu0 0.0
    %1516 = vmatpush1.msra.mxu0 0.0
    %1517 = vmatprep.subr.mxu0 0.0
    %1518 = vmatpush1.msra.mxu0 0.0
    %1519 = vmatprep.subr.mxu0 0.0
    %1520 = vmatpush1.msra.mxu0 0.0
    %1521 = vmatprep.subr.mxu0 0.0
    %1522 = vmatpush1.msra.mxu0 0.0
    %1523 = vmatprep.subr.mxu0 0.0
    %1524 = vmatpush1.msra.mxu0 0.0
    %1525 = vmatprep.subr.mxu0 0.0
    %1526 = vmatpush1.msra.mxu0 0.0
    %1527 = vmatprep.subr.mxu0 0.0
    %1528 = vmatpush1.msra.mxu0 0.0
    %1529 = vmatprep.subr.mxu0 0.0
    %1530 = vmatpush1.msra.mxu0 0.0
    %1531 = vmatprep.subr.mxu0 0.0
    %1532 = vmatpush1.msra.mxu0 0.0
    %1533 = vmatprep.subr.mxu0 0.0
    %1534 = vmatpush1.msra.mxu0 0.0
    %1535 = vmatprep.subr.mxu0 0.0
    %1536 = vmatpush1.msra.mxu0 0.0
    %1537 = vmatprep.subr.mxu0 0.0
    %1538 = vmatpush1.msra.mxu0 0.0
    %1539 = vmatprep.subr.mxu0 0.0
    %1540 = vmatpush1.msra.mxu0 0.0
    %1541 = vmatprep.subr.mxu0 0.0
    %1542 = vmatpush1.msra.mxu0 0.0
    %1543 = vmatprep.subr.mxu0 0.0
    %1544 = vmatpush1.msra.mxu0 0.0
    %1545 = vmatprep.subr.mxu0 0.0
    %1546 = vmatpush1.msra.mxu0 0.0
    %1547 = vmatprep.subr.mxu0 0.0
    %1548 = vmatpush1.msra.mxu0 0.0
    %1549 = vmatprep.subr.mxu0 0.0
    %1550 = vmatpush1.msra.mxu0 0.0
    %1551 = vmatprep.subr.mxu0 0.0
    %1552 = vmatpush1.msra.mxu0 0.0
    %1553 = vmatprep.mubr.f32.mxu0 0.0
    %1554 = vmatmul.mubr.f32.gmra.mrb[0].mxu0 %v413
    %v1555 = vpop.f32.mrb[0].mxu0
    %v1556 = vadd.f32 %v1414, %v1555
    %v1557 = vpop.f32.mrb[0].mxu0
    %v1558 = vadd.f32 %v1416, %v1557
    %1559 = vdwg.mxu0
    %s1560 = scalar_lea.vmem [#allocation11], 5
    %v1561 = vld [vmem:[%s1560] ss:$8 sm:$0xf]
    %v1563 = vlaneseq
    %v1564 = vshrl.u32 %v1563, 7
    %v1565 = vsub.s32 0, %v1564
    %v1566 = vrot.slane %v1561, %v1565
    %v1567 = vlaneseq
    %v1568 = vshrl.u32 %v1567, 7
    %v1569 = vsub.s32 1, %v1568
    %v1570 = vrot.slane %v1561, %v1569
    %v1571 = vlaneseq
    %v1572 = vshrl.u32 %v1571, 7
    %v1573 = vsub.s32 2, %v1572
    %v1574 = vrot.slane %v1561, %v1573
    %v1575 = vlaneseq
    %v1576 = vshrl.u32 %v1575, 7
    %v1577 = vsub.s32 3, %v1576
    %v1578 = vrot.slane %v1561, %v1577
    %v1583 = vadd.f32 %v1485, %v1566
    %v1584 = vadd.f32 %v1487, %v1570
    %v1585 = vadd.f32 %v1556, %v1574
    %v1586 = vadd.f32 %v1558, %v1578
    %v1587 = vmax.f32 %v1583, 0.0
    %v1588 = vmax.f32 %v1584, 0.0
    %v1589 = vmax.f32 %v1585, 0.0
    %v1590 = vmax.f32 %v1586, 0.0
    %v1591 = vld [vmem:[#allocation10] sm:$0xff]
    %v1592 = vld [vmem:[#allocation10 + $0x8] sm:$0xff]
    %v1593 = vld [vmem:[#allocation10 + $0x10] sm:$0xff]
    %v1594 = vld [vmem:[#allocation10 + $0x18] sm:$0xff]
    %v1595 = vld [vmem:[#allocation10 + $0x20] sm:$0xff]
    %v1596 = vld [vmem:[#allocation10 + $0x28] sm:$0xff]
    %v1597 = vld [vmem:[#allocation10 + $0x30] sm:$0xff]
    %v1598 = vld [vmem:[#allocation10 + $0x38] sm:$0xff]
    %v1599 = vld [vmem:[#allocation10 + $0x40] sm:$0xff]
    %v1600 = vld [vmem:[#allocation10 + $0x48] sm:$0xff]
    %v1601 = vld [vmem:[#allocation10 + $0x50] sm:$0xff]
    %v1602 = vld [vmem:[#allocation10 + $0x58] sm:$0xff]
    %v1603 = vld [vmem:[#allocation10 + $0x60] sm:$0xff]
    %v1604 = vld [vmem:[#allocation10 + $0x68] sm:$0xff]
    %v1605 = vld [vmem:[#allocation10 + $0x70] sm:$0xff]
    %v1606 = vld [vmem:[#allocation10 + $0x78] sm:$0xff]
    %v1607 = vld [vmem:[#allocation10 + $0x80] sm:$0xff]
    %v1608 = vld [vmem:[#allocation10 + $0x88] sm:$0xff]
    %v1609 = vld [vmem:[#allocation10 + $0x90] sm:$0xff]
    %v1610 = vld [vmem:[#allocation10 + $0x98] sm:$0xff]
    %v1611 = vld [vmem:[#allocation10 + $0xa0] sm:$0xff]
    %v1612 = vld [vmem:[#allocation10 + $0xa8] sm:$0xff]
    %v1613 = vld [vmem:[#allocation10 + $0xb0] sm:$0xff]
    %v1614 = vld [vmem:[#allocation10 + $0xb8] sm:$0xff]
    %v1615 = vld [vmem:[#allocation10 + $0xc0] sm:$0xff]
    %v1616 = vld [vmem:[#allocation10 + $0xc8] sm:$0xff]
    %v1617 = vld [vmem:[#allocation10 + $0xd0] sm:$0xff]
    %v1618 = vld [vmem:[#allocation10 + $0xd8] sm:$0xff]
    %v1619 = vld [vmem:[#allocation10 + $0xe0] sm:$0xff]
    %v1620 = vld [vmem:[#allocation10 + $0xe8] sm:$0xff]
    %v1621 = vld [vmem:[#allocation10 + $0xf0] sm:$0xff]
    %v1622 = vld [vmem:[#allocation10 + $0xf8] sm:$0xff]
    %v1623 = vld [vmem:[#allocation10 + $0x100] sm:$0xff]
    %v1624 = vld [vmem:[#allocation10 + $0x108] sm:$0xff]
    %v1625 = vld [vmem:[#allocation10 + $0x110] sm:$0xff]
    %v1626 = vld [vmem:[#allocation10 + $0x118] sm:$0xff]
    %v1627 = vld [vmem:[#allocation10 + $0x120] sm:$0xff]
    %v1628 = vld [vmem:[#allocation10 + $0x128] sm:$0xff]
    %v1629 = vld [vmem:[#allocation10 + $0x130] sm:$0xff]
    %v1630 = vld [vmem:[#allocation10 + $0x138] sm:$0xff]
    %v1631 = vld [vmem:[#allocation10 + $0x140] sm:$0xff]
    %v1632 = vld [vmem:[#allocation10 + $0x148] sm:$0xff]
    %v1633 = vld [vmem:[#allocation10 + $0x150] sm:$0xff]
    %v1634 = vld [vmem:[#allocation10 + $0x158] sm:$0xff]
    %v1635 = vld [vmem:[#allocation10 + $0x160] sm:$0xff]
    %v1636 = vld [vmem:[#allocation10 + $0x168] sm:$0xff]
    %v1637 = vld [vmem:[#allocation10 + $0x170] sm:$0xff]
    %v1638 = vld [vmem:[#allocation10 + $0x178] sm:$0xff]
    %v1639 = vld [vmem:[#allocation10 + $0x180] sm:$0xff]
    %v1640 = vld [vmem:[#allocation10 + $0x188] sm:$0xff]
    %v1641 = vld [vmem:[#allocation10 + $0x190] sm:$0xff]
    %v1642 = vld [vmem:[#allocation10 + $0x198] sm:$0xff]
    %v1643 = vld [vmem:[#allocation10 + $0x1a0] sm:$0xff]
    %v1644 = vld [vmem:[#allocation10 + $0x1a8] sm:$0xff]
    %v1645 = vld [vmem:[#allocation10 + $0x1b0] sm:$0xff]
    %v1646 = vld [vmem:[#allocation10 + $0x1b8] sm:$0xff]
    %v1647 = vld [vmem:[#allocation10 + $0x1c0] sm:$0xff]
    %v1648 = vld [vmem:[#allocation10 + $0x1c8] sm:$0xff]
    %v1649 = vld [vmem:[#allocation10 + $0x1d0] sm:$0xff]
    %v1650 = vld [vmem:[#allocation10 + $0x1d8] sm:$0xff]
    %v1651 = vld [vmem:[#allocation10 + $0x1e0] sm:$0xff]
    %v1652 = vld [vmem:[#allocation10 + $0x1e8] sm:$0xff]
    %v1653 = vld [vmem:[#allocation10 + $0x1f0] sm:$0xff]
    %v1654 = vld [vmem:[#allocation10 + $0x1f8] sm:$0xff]
    %v1655 = vld [vmem:[#allocation10 + $0x200] sm:$0xff]
    %v1656 = vld [vmem:[#allocation10 + $0x208] sm:$0xff]
    %v1657 = vld [vmem:[#allocation10 + $0x210] sm:$0xff]
    %v1658 = vld [vmem:[#allocation10 + $0x218] sm:$0xff]
    %v1659 = vld [vmem:[#allocation10 + $0x220] sm:$0xff]
    %v1660 = vld [vmem:[#allocation10 + $0x228] sm:$0xff]
    %v1661 = vld [vmem:[#allocation10 + $0x230] sm:$0xff]
    %v1662 = vld [vmem:[#allocation10 + $0x238] sm:$0xff]
    %v1663 = vld [vmem:[#allocation10 + $0x240] sm:$0xff]
    %v1664 = vld [vmem:[#allocation10 + $0x248] sm:$0xff]
    %v1665 = vld [vmem:[#allocation10 + $0x250] sm:$0xff]
    %v1666 = vld [vmem:[#allocation10 + $0x258] sm:$0xff]
    %v1667 = vld [vmem:[#allocation10 + $0x260] sm:$0xff]
    %v1668 = vld [vmem:[#allocation10 + $0x268] sm:$0xff]
    %v1669 = vld [vmem:[#allocation10 + $0x270] sm:$0xff]
    %v1670 = vld [vmem:[#allocation10 + $0x278] sm:$0xff]
    %v1671 = vld [vmem:[#allocation10 + $0x280] sm:$0xff]
    %v1672 = vld [vmem:[#allocation10 + $0x288] sm:$0xff]
    %v1673 = vld [vmem:[#allocation10 + $0x290] sm:$0xff]
    %v1674 = vld [vmem:[#allocation10 + $0x298] sm:$0xff]
    %v1675 = vld [vmem:[#allocation10 + $0x2a0] sm:$0xff]
    %v1676 = vld [vmem:[#allocation10 + $0x2a8] sm:$0xff]
    %v1677 = vld [vmem:[#allocation10 + $0x2b0] sm:$0xff]
    %v1678 = vld [vmem:[#allocation10 + $0x2b8] sm:$0xff]
    %v1679 = vld [vmem:[#allocation10 + $0x2c0] sm:$0xff]
    %v1680 = vld [vmem:[#allocation10 + $0x2c8] sm:$0xff]
    %v1681 = vld [vmem:[#allocation10 + $0x2d0] sm:$0xff]
    %v1682 = vld [vmem:[#allocation10 + $0x2d8] sm:$0xff]
    %v1683 = vld [vmem:[#allocation10 + $0x2e0] sm:$0xff]
    %v1684 = vld [vmem:[#allocation10 + $0x2e8] sm:$0xff]
    %v1685 = vld [vmem:[#allocation10 + $0x2f0] sm:$0xff]
    %v1686 = vld [vmem:[#allocation10 + $0x2f8] sm:$0xff]
    %v1687 = vld [vmem:[#allocation10 + $0x300] sm:$0xff]
    %v1688 = vld [vmem:[#allocation10 + $0x308] sm:$0xff]
    %v1689 = vld [vmem:[#allocation10 + $0x310] sm:$0xff]
    %v1690 = vld [vmem:[#allocation10 + $0x318] sm:$0xff]
    %v1691 = vld [vmem:[#allocation10 + $0x320] sm:$0xff]
    %v1692 = vld [vmem:[#allocation10 + $0x328] sm:$0xff]
    %v1693 = vld [vmem:[#allocation10 + $0x330] sm:$0xff]
    %v1694 = vld [vmem:[#allocation10 + $0x338] sm:$0xff]
    %v1695 = vld [vmem:[#allocation10 + $0x340] sm:$0xff]
    %v1696 = vld [vmem:[#allocation10 + $0x348] sm:$0xff]
    %v1697 = vld [vmem:[#allocation10 + $0x350] sm:$0xff]
    %v1698 = vld [vmem:[#allocation10 + $0x358] sm:$0xff]
    %v1699 = vld [vmem:[#allocation10 + $0x360] sm:$0xff]
    %v1700 = vld [vmem:[#allocation10 + $0x368] sm:$0xff]
    %v1701 = vld [vmem:[#allocation10 + $0x370] sm:$0xff]
    %v1702 = vld [vmem:[#allocation10 + $0x378] sm:$0xff]
    %v1703 = vld [vmem:[#allocation10 + $0x380] sm:$0xff]
    %v1704 = vld [vmem:[#allocation10 + $0x388] sm:$0xff]
    %v1705 = vld [vmem:[#allocation10 + $0x390] sm:$0xff]
    %v1706 = vld [vmem:[#allocation10 + $0x398] sm:$0xff]
    %v1707 = vld [vmem:[#allocation10 + $0x3a0] sm:$0xff]
    %v1708 = vld [vmem:[#allocation10 + $0x3a8] sm:$0xff]
    %v1709 = vld [vmem:[#allocation10 + $0x3b0] sm:$0xff]
    %v1710 = vld [vmem:[#allocation10 + $0x3b8] sm:$0xff]
    %v1711 = vld [vmem:[#allocation10 + $0x3c0] sm:$0xff]
    %v1712 = vld [vmem:[#allocation10 + $0x3c8] sm:$0xff]
    %v1713 = vld [vmem:[#allocation10 + $0x3d0] sm:$0xff]
    %v1714 = vld [vmem:[#allocation10 + $0x3d8] sm:$0xff]
    %v1715 = vld [vmem:[#allocation10 + $0x3e0] sm:$0xff]
    %v1716 = vld [vmem:[#allocation10 + $0x3e8] sm:$0xff]
    %v1717 = vld [vmem:[#allocation10 + $0x3f0] sm:$0xff]
    %v1718 = vld [vmem:[#allocation10 + $0x3f8] sm:$0xff]
    %s1719 = scalar_lea.vmem [#allocation11], 6
    %v1720 = vld [vmem:[%s1719] ss:$8 sm:$0x3]
    %v1722 = vlaneseq
    %v1723 = vshrl.u32 %v1722, 7
    %v1724 = vsub.s32 0, %v1723
    %v1725 = vrot.slane %v1720, %v1724
    %v1726 = vlaneseq
    %v1727 = vshrl.u32 %v1726, 7
    %v1728 = vsub.s32 1, %v1727
    %v1729 = vrot.slane %v1720, %v1728
    %1732 = vmatprep.subr.mxu0 %v1592
    %1733 = vmatpush1.msra.mxu0 %v1591
    %1734 = vmatprep.subr.mxu0 %v1594
    %1735 = vmatpush1.msra.mxu0 %v1593
    %1736 = vmatprep.subr.mxu0 %v1596
    %1737 = vmatpush1.msra.mxu0 %v1595
    %1738 = vmatprep.subr.mxu0 %v1598
    %1739 = vmatpush1.msra.mxu0 %v1597
    %1740 = vmatprep.subr.mxu0 %v1600
    %1741 = vmatpush1.msra.mxu0 %v1599
    %1742 = vmatprep.subr.mxu0 %v1602
    %1743 = vmatpush1.msra.mxu0 %v1601
    %1744 = vmatprep.subr.mxu0 %v1604
    %1745 = vmatpush1.msra.mxu0 %v1603
    %1746 = vmatprep.subr.mxu0 %v1606
    %1747 = vmatpush1.msra.mxu0 %v1605
    %1748 = vmatprep.subr.mxu0 %v1608
    %1749 = vmatpush1.msra.mxu0 %v1607
    %1750 = vmatprep.subr.mxu0 %v1610
    %1751 = vmatpush1.msra.mxu0 %v1609
    %1752 = vmatprep.subr.mxu0 %v1612
    %1753 = vmatpush1.msra.mxu0 %v1611
    %1754 = vmatprep.subr.mxu0 %v1614
    %1755 = vmatpush1.msra.mxu0 %v1613
    %1756 = vmatprep.subr.mxu0 %v1616
    %1757 = vmatpush1.msra.mxu0 %v1615
    %1758 = vmatprep.subr.mxu0 %v1618
    %1759 = vmatpush1.msra.mxu0 %v1617
    %1760 = vmatprep.subr.mxu0 %v1620
    %1761 = vmatpush1.msra.mxu0 %v1619
    %1762 = vmatprep.subr.mxu0 %v1622
    %1763 = vmatpush1.msra.mxu0 %v1621
    %1764 = vmatprep.subr.mxu0 %v1624
    %1765 = vmatpush1.msra.mxu0 %v1623
    %1766 = vmatprep.subr.mxu0 %v1626
    %1767 = vmatpush1.msra.mxu0 %v1625
    %1768 = vmatprep.subr.mxu0 %v1628
    %1769 = vmatpush1.msra.mxu0 %v1627
    %1770 = vmatprep.subr.mxu0 %v1630
    %1771 = vmatpush1.msra.mxu0 %v1629
    %1772 = vmatprep.subr.mxu0 %v1632
    %1773 = vmatpush1.msra.mxu0 %v1631
    %1774 = vmatprep.subr.mxu0 %v1634
    %1775 = vmatpush1.msra.mxu0 %v1633
    %1776 = vmatprep.subr.mxu0 %v1636
    %1777 = vmatpush1.msra.mxu0 %v1635
    %1778 = vmatprep.subr.mxu0 %v1638
    %1779 = vmatpush1.msra.mxu0 %v1637
    %1780 = vmatprep.subr.mxu0 %v1640
    %1781 = vmatpush1.msra.mxu0 %v1639
    %1782 = vmatprep.subr.mxu0 %v1642
    %1783 = vmatpush1.msra.mxu0 %v1641
    %1784 = vmatprep.subr.mxu0 %v1644
    %1785 = vmatpush1.msra.mxu0 %v1643
    %1786 = vmatprep.subr.mxu0 %v1646
    %1787 = vmatpush1.msra.mxu0 %v1645
    %1788 = vmatprep.subr.mxu0 %v1648
    %1789 = vmatpush1.msra.mxu0 %v1647
    %1790 = vmatprep.subr.mxu0 %v1650
    %1791 = vmatpush1.msra.mxu0 %v1649
    %1792 = vmatprep.subr.mxu0 %v1652
    %1793 = vmatpush1.msra.mxu0 %v1651
    %1794 = vmatprep.subr.mxu0 %v1654
    %1795 = vmatpush1.msra.mxu0 %v1653
    %1796 = vmatprep.mubr.f32.mxu0 %v1588
    %1797 = vmatmul.mubr.f32.gmra.mrb[0].mxu0 %v1587
    %v1798 = vpop.f32.mrb[0].mxu0
    %v1799 = vadd.f32 %v1725, %v1798
    %v1800 = vpop.f32.mrb[0].mxu0
    %v1801 = vadd.f32 %v1729, %v1800
    %1802 = vdwg.mxu0
    %1803 = vmatprep.subr.mxu0 %v1656
    %1804 = vmatpush1.msra.mxu0 %v1655
    %1805 = vmatprep.subr.mxu0 %v1658
    %1806 = vmatpush1.msra.mxu0 %v1657
    %1807 = vmatprep.subr.mxu0 %v1660
    %1808 = vmatpush1.msra.mxu0 %v1659
    %1809 = vmatprep.subr.mxu0 %v1662
    %1810 = vmatpush1.msra.mxu0 %v1661
    %1811 = vmatprep.subr.mxu0 %v1664
    %1812 = vmatpush1.msra.mxu0 %v1663
    %1813 = vmatprep.subr.mxu0 %v1666
    %1814 = vmatpush1.msra.mxu0 %v1665
    %1815 = vmatprep.subr.mxu0 %v1668
    %1816 = vmatpush1.msra.mxu0 %v1667
    %1817 = vmatprep.subr.mxu0 %v1670
    %1818 = vmatpush1.msra.mxu0 %v1669
    %1819 = vmatprep.subr.mxu0 %v1672
    %1820 = vmatpush1.msra.mxu0 %v1671
    %1821 = vmatprep.subr.mxu0 %v1674
    %1822 = vmatpush1.msra.mxu0 %v1673
    %1823 = vmatprep.subr.mxu0 %v1676
    %1824 = vmatpush1.msra.mxu0 %v1675
    %1825 = vmatprep.subr.mxu0 %v1678
    %1826 = vmatpush1.msra.mxu0 %v1677
    %1827 = vmatprep.subr.mxu0 %v1680
    %1828 = vmatpush1.msra.mxu0 %v1679
    %1829 = vmatprep.subr.mxu0 %v1682
    %1830 = vmatpush1.msra.mxu0 %v1681
    %1831 = vmatprep.subr.mxu0 %v1684
    %1832 = vmatpush1.msra.mxu0 %v1683
    %1833 = vmatprep.subr.mxu0 %v1686
    %1834 = vmatpush1.msra.mxu0 %v1685
    %1835 = vmatprep.subr.mxu0 %v1688
    %1836 = vmatpush1.msra.mxu0 %v1687
    %1837 = vmatprep.subr.mxu0 %v1690
    %1838 = vmatpush1.msra.mxu0 %v1689
    %1839 = vmatprep.subr.mxu0 %v1692
    %1840 = vmatpush1.msra.mxu0 %v1691
    %1841 = vmatprep.subr.mxu0 %v1694
    %1842 = vmatpush1.msra.mxu0 %v1693
    %1843 = vmatprep.subr.mxu0 %v1696
    %1844 = vmatpush1.msra.mxu0 %v1695
    %1845 = vmatprep.subr.mxu0 %v1698
    %1846 = vmatpush1.msra.mxu0 %v1697
    %1847 = vmatprep.subr.mxu0 %v1700
    %1848 = vmatpush1.msra.mxu0 %v1699
    %1849 = vmatprep.subr.mxu0 %v1702
    %1850 = vmatpush1.msra.mxu0 %v1701
    %1851 = vmatprep.subr.mxu0 %v1704
    %1852 = vmatpush1.msra.mxu0 %v1703
    %1853 = vmatprep.subr.mxu0 %v1706
    %1854 = vmatpush1.msra.mxu0 %v1705
    %1855 = vmatprep.subr.mxu0 %v1708
    %1856 = vmatpush1.msra.mxu0 %v1707
    %1857 = vmatprep.subr.mxu0 %v1710
    %1858 = vmatpush1.msra.mxu0 %v1709
    %1859 = vmatprep.subr.mxu0 %v1712
    %1860 = vmatpush1.msra.mxu0 %v1711
    %1861 = vmatprep.subr.mxu0 %v1714
    %1862 = vmatpush1.msra.mxu0 %v1713
    %1863 = vmatprep.subr.mxu0 %v1716
    %1864 = vmatpush1.msra.mxu0 %v1715
    %1865 = vmatprep.subr.mxu0 %v1718
    %1866 = vmatpush1.msra.mxu0 %v1717
    %1867 = vmatprep.mubr.f32.mxu0 %v1590
    %1868 = vmatmul.mubr.f32.gmra.mrb[0].mxu0 %v1589
    %v1869 = vpop.f32.mrb[0].mxu0
    %v1870 = vadd.f32 %v1799, %v1869
    %v1871 = vpop.f32.mrb[0].mxu0
    %v1872 = vadd.f32 %v1801, %v1871
    %1873 = vdwg.mxu0
    %v1874 = vmax.f32 %v1870, 0.0
    %v1875 = vmax.f32 %v1872, 0.0
    %v1876 = vld [vmem:[%s9] sm:$0xff]
    %v1877 = vld [vmem:[%s9 + $0x8] sm:$0xff]
    %v1878 = vld [vmem:[%s9 + $0x10] sm:$0xff]
    %v1879 = vld [vmem:[%s9 + $0x18] sm:$0xff]
    %v1880 = vld [vmem:[%s9 + $0x20] sm:$0xff]
    %v1881 = vld [vmem:[%s9 + $0x28] sm:$0xff]
    %v1882 = vld [vmem:[%s9 + $0x30] sm:$0xff]
    %v1883 = vld [vmem:[%s9 + $0x38] sm:$0xff]
    %v1884 = vld [vmem:[%s9 + $0x40] sm:$0xff]
    %v1885 = vld [vmem:[%s9 + $0x48] sm:$0xff]
    %v1886 = vld [vmem:[%s9 + $0x50] sm:$0xff]
    %v1887 = vld [vmem:[%s9 + $0x58] sm:$0xff]
    %v1888 = vld [vmem:[%s9 + $0x60] sm:$0xff]
    %v1889 = vld [vmem:[%s9 + $0x68] sm:$0xff]
    %v1890 = vld [vmem:[%s9 + $0x70] sm:$0xff]
    %v1891 = vld [vmem:[%s9 + $0x78] sm:$0xff]
    %v1892 = vld [vmem:[%s9 + $0x80] sm:$0xff]
    %v1893 = vld [vmem:[%s9 + $0x88] sm:$0xff]
    %v1894 = vld [vmem:[%s9 + $0x90] sm:$0xff]
    %v1895 = vld [vmem:[%s9 + $0x98] sm:$0xff]
    %v1896 = vld [vmem:[%s9 + $0xa0] sm:$0xff]
    %v1897 = vld [vmem:[%s9 + $0xa8] sm:$0xff]
    %v1898 = vld [vmem:[%s9 + $0xb0] sm:$0xff]
    %v1899 = vld [vmem:[%s9 + $0xb8] sm:$0xff]
    %v1900 = vld [vmem:[%s9 + $0xc0] sm:$0xff]
    %v1901 = vld [vmem:[%s9 + $0xc8] sm:$0xff]
    %v1902 = vld [vmem:[%s9 + $0xd0] sm:$0xff]
    %v1903 = vld [vmem:[%s9 + $0xd8] sm:$0xff]
    %v1904 = vld [vmem:[%s9 + $0xe0] sm:$0xff]
    %v1905 = vld [vmem:[%s9 + $0xe8] sm:$0xff]
    %v1906 = vld [vmem:[%s9 + $0xf0] sm:$0xff]
    %v1907 = vld [vmem:[%s9 + $0xf8] sm:$0xff]
    %v1908 = vld [vmem:[#allocation11 + $0x7] ss:$0 sm:$0xff]
    %1909 = vmatprep.subr.mxu0 0.0
    %1910 = vmatpush1.msra.mxu0 %v1876
    %1911 = vmatprep.subr.mxu0 0.0
    %1912 = vmatpush1.msra.mxu0 %v1877
    %1913 = vmatprep.subr.mxu0 0.0
    %1914 = vmatpush1.msra.mxu0 %v1878
    %1915 = vmatprep.subr.mxu0 0.0
    %1916 = vmatpush1.msra.mxu0 %v1879
    %1917 = vmatprep.subr.mxu0 0.0
    %1918 = vmatpush1.msra.mxu0 %v1880
    %1919 = vmatprep.subr.mxu0 0.0
    %1920 = vmatpush1.msra.mxu0 %v1881
    %1921 = vmatprep.subr.mxu0 0.0
    %1922 = vmatpush1.msra.mxu0 %v1882
    %1923 = vmatprep.subr.mxu0 0.0
    %1924 = vmatpush1.msra.mxu0 %v1883
    %1925 = vmatprep.subr.mxu0 0.0
    %1926 = vmatpush1.msra.mxu0 %v1884
    %1927 = vmatprep.subr.mxu0 0.0
    %1928 = vmatpush1.msra.mxu0 %v1885
    %1929 = vmatprep.subr.mxu0 0.0
    %1930 = vmatpush1.msra.mxu0 %v1886
    %1931 = vmatprep.subr.mxu0 0.0
    %1932 = vmatpush1.msra.mxu0 %v1887
    %1933 = vmatprep.subr.mxu0 0.0
    %1934 = vmatpush1.msra.mxu0 %v1888
    %1935 = vmatprep.subr.mxu0 0.0
    %1936 = vmatpush1.msra.mxu0 %v1889
    %1937 = vmatprep.subr.mxu0 0.0
    %1938 = vmatpush1.msra.mxu0 %v1890
    %1939 = vmatprep.subr.mxu0 0.0
    %1940 = vmatpush1.msra.mxu0 %v1891
    %1941 = vmatprep.subr.mxu0 0.0
    %1942 = vmatpush1.msra.mxu0 %v1892
    %1943 = vmatprep.subr.mxu0 0.0
    %1944 = vmatpush1.msra.mxu0 %v1893
    %1945 = vmatprep.subr.mxu0 0.0
    %1946 = vmatpush1.msra.mxu0 %v1894
    %1947 = vmatprep.subr.mxu0 0.0
    %1948 = vmatpush1.msra.mxu0 %v1895
    %1949 = vmatprep.subr.mxu0 0.0
    %1950 = vmatpush1.msra.mxu0 %v1896
    %1951 = vmatprep.subr.mxu0 0.0
    %1952 = vmatpush1.msra.mxu0 %v1897
    %1953 = vmatprep.subr.mxu0 0.0
    %1954 = vmatpush1.msra.mxu0 %v1898
    %1955 = vmatprep.subr.mxu0 0.0
    %1956 = vmatpush1.msra.mxu0 %v1899
    %1957 = vmatprep.subr.mxu0 0.0
    %1958 = vmatpush1.msra.mxu0 %v1900
    %1959 = vmatprep.subr.mxu0 0.0
    %1960 = vmatpush1.msra.mxu0 %v1901
    %1961 = vmatprep.subr.mxu0 0.0
    %1962 = vmatpush1.msra.mxu0 %v1902
    %1963 = vmatprep.subr.mxu0 0.0
    %1964 = vmatpush1.msra.mxu0 %v1903
    %1965 = vmatprep.subr.mxu0 0.0
    %1966 = vmatpush1.msra.mxu0 %v1904
    %1967 = vmatprep.subr.mxu0 0.0
    %1968 = vmatpush1.msra.mxu0 %v1905
    %1969 = vmatprep.subr.mxu0 0.0
    %1970 = vmatpush1.msra.mxu0 %v1906
    %1971 = vmatprep.subr.mxu0 0.0
    %1972 = vmatpush1.msra.mxu0 %v1907
    %1973 = vmatprep.mubr.f32.mxu0 %v1875
    %1974 = vmatmul.mubr.f32.gmra.mrb[0].mxu0 %v1874
    %v1975 = vpop.f32.mrb[0].mxu0
    %v1976 = vadd.f32 %v1908, %v1975
    %v1977 = vpop.f32.mrb[0].mxu0
    %1978 = vdwg.mxu0
    %vm1979 = vcmask 19456
    %v1980 = vsel %vm1979, %v1976, 0.0
    %1981 = vadd.xlane.f32.xlu0 %v1980
    %v1982 = vpop.xlane.xlu0 %1981
    %v1983 = vrcp.pop 3.0
    %v1984 = vmul.f32 %v1982, %v1983
    %v1985 = vsub.f32 %v1976, %v1984
    %1987 = vset.pattern.permute.xlu0 3
    %1988 = vperm.xlu0 %1987, %v1976
    %v1989 = vpop.permute.xlu0 %1988
    %v1991 = vadd.f32 %v1989, %v1985
    %1992 = vst.msk [vmem:[#allocation13] sm:$0xf] %vm1979, %v1991
    // Predicated region
    $region70: #{tpu_custom_call.1} parent=1 // pred_check
      _
    $region71: #{tpu_custom_call.1} parent=1 // pred_check_branch
      %1994 = sbr.rel (0) target = $region73
    $region72: #{tpu_custom_call.1} parent=1 // pred_region
      %s1996 = ssub.s32 64, 64
      %1997 = vsyncadd [#allocation4], %s1996
      %s1999 = sshll.u32 [#allocation13], 4
      %s2000 = int_to_ptr.vmem [resolvable:$true] %s1999
      %2002 = dma.vmem_to_hbm [thread:$0]  %s2000, 64, %s11, [#allocation4]
    $region73: #{tpu_custom_call.1} parent=1 // pred_fallthru
      _
    // Predicated region
    $region74: #{tpu_custom_call.1} parent=1 // pred_check
      _
    $region75: #{tpu_custom_call.1} parent=1 // pred_check_branch
      %2004 = sbr.rel (0) target = $region77
    $region76: #{tpu_custom_call.1} parent=1 // pred_region
      %2005 = dma.done [#allocation4], 64
    $region77: #{tpu_custom_call.1} parent=1 // pred_fallthru
      _
    %2006 = vsyncpa [#allocation3], 1
    %2007 = vsyncpa [#allocation6], 1
    %2008 = vsyncpa [#allocation9], 1
    %2009 = vsyncpa [#allocation12], 1
    %2010 = vsyncpa [#allocation4], 1

</llo_original>
